<compile_context>
chip_gen: v6e
topology: v6e:2x2x1
jax: 0.10.0
libtpu: 0.0.40
codegen_flags: <defaults>
</compile_context>

<pallas_src>
import jax
import jax.numpy as jnp
from jax.experimental import pallas as pl
from jax.experimental.pallas import tpu as pltpu

LANE = 128      # vreg lane width
SUBLANE = 16    # bf16 sublane packing granularity


def _round_up(n, m):
    return ((n + m - 1) // m) * m


def target_model_kernel(x_ref,
                        w1_ref, b1_ref,   # encoder layer 1
                        w2_ref, b2_ref,   # encoder layer 2 (latent)
                        w3_ref, b3_ref,   # predictor layer 1
                        w4_ref, b4_ref,   # predictor output layer (lane-padded)
                        out_ref):
    """Fused encode + predict for one (TB, D_in) batch tile.

    Matmul operands are bf16 (MXU), accumulation and all elementwise math
    (bias add, ReLU, sigmoid) are f32.
    """
    x = x_ref[...]  # (TB, D_in) bf16

    # --- target_encoder.encode(X_target) ---
    h1 = jnp.dot(x, w1_ref[...], preferred_element_type=jnp.float32) + b1_ref[...]
    h1 = jnp.maximum(h1, 0.0).astype(jnp.bfloat16)
    z = jnp.dot(h1, w2_ref[...], preferred_element_type=jnp.float32) + b2_ref[...]
    z = jnp.maximum(z, 0.0).astype(jnp.bfloat16)

    # --- source_predcitor.predictor(x_tar) ---
    p1 = jnp.dot(z, w3_ref[...], preferred_element_type=jnp.float32) + b3_ref[...]
    p1 = jnp.maximum(p1, 0.0).astype(jnp.bfloat16)
    logits = jnp.dot(p1, w4_ref[...], preferred_element_type=jnp.float32) + b4_ref[...]
    out_ref[...] = jax.nn.sigmoid(logits)


def target_model_forward(x, params, *, tb=256):
    """Runs the fused TargetModel forward. x: (B, D_in) f32. Returns (B, D_out) f32."""
    w1, b1, w2, b2, w3, b3, w4, b4 = params
    B, d_in = x.shape
    h_enc = w1.shape[1]
    d_lat = w2.shape[1]
    h_pred = w3.shape[1]
    d_out = w4.shape[1]

    # Lane-dense output: pad the last layer's N to a 128 multiple; slice later.
    d_out_pad = _round_up(d_out, LANE)

    # bf16 weights / activations (f32 accumulation on the MXU); biases stay f32.
    x_bf = x.astype(jnp.bfloat16)
    w1b = w1.astype(jnp.bfloat16)
    w2b = w2.astype(jnp.bfloat16)
    w3b = w3.astype(jnp.bfloat16)
    w4b = jnp.zeros((h_pred, d_out_pad), jnp.bfloat16).at[:, :d_out].set(
        w4.astype(jnp.bfloat16))
    b1f = b1.astype(jnp.float32)
    b2f = b2.astype(jnp.float32)
    b3f = b3.astype(jnp.float32)
    b4f = jnp.zeros((1, d_out_pad), jnp.float32).at[:, :d_out].set(
        b4.astype(jnp.float32))

    # Batch tiling: TB a multiple of 16, batch padded to a tile multiple.
    tb = _round_up(max(SUBLANE, min(tb, _round_up(B, SUBLANE))), SUBLANE)
    b_pad = _round_up(B, tb)
    if b_pad != B:
        x_bf = jnp.pad(x_bf, ((0, b_pad - B), (0, 0)))
    n_steps = b_pad // tb

    weights = (w1b, b1f, w2b, b2f, w3b, b3f, w4b, b4f)

    def const_spec(a):
        # Whole array as one block, same block every grid step -> VMEM-resident.
        return pl.BlockSpec(a.shape, lambda i: (0,) * a.ndim)

    in_specs = [pl.BlockSpec((tb, d_in), lambda i: (i, 0))]  # streamed x tiles
    in_specs += [const_spec(a) for a in weights]
    out_spec = pl.BlockSpec((tb, d_out_pad), lambda i: (i, 0))

    # VMEM budget: resident weights + double-buffered x/out tiles + activations,
    # 2x headroom, capped at 64 MiB (v7x-safe), floored at the 32 MiB default.
    weight_bytes = sum(a.size * a.dtype.itemsize for a in weights)
    tile_bytes = 2 * (tb * d_in * 2 + tb * d_out_pad * 4)          # double-buffered
    act_bytes = 4 * tb * max(h_enc, d_lat, h_pred, d_out_pad) * 4  # in-flight f32 acts
    vmem_limit = int(min(64 << 20,
                         max(32 << 20, 2 * (weight_bytes + tile_bytes + act_bytes))))

    out_pad = pl.pallas_call(
        target_model_kernel,
        out_shape=jax.ShapeDtypeStruct((b_pad, d_out_pad), jnp.float32),
        grid=(n_steps,),
        in_specs=in_specs,
        out_specs=out_spec,
        compiler_params=pltpu.CompilerParams(
            dimension_semantics=("parallel",),  # batch steps shard across v7x's 2 TCs
            vmem_limit_bytes=vmem_limit),
    )(x_bf, *weights)

    return out_pad[:B, :d_out]


def init_params(key, d_in, h_enc, d_lat, h_pred, d_out):
    """Deterministic synthetic parameters (nn.Linear-shaped, pre-transposed to (in, out))."""
    ks = jax.random.split(key, 8)

    def linear(kw, kb, fan_in, fan_out):
        lim = 1.0 / jnp.sqrt(fan_in)
        w = jax.random.uniform(kw, (fan_in, fan_out), jnp.float32, -lim, lim)
        b = jax.random.uniform(kb, (1, fan_out), jnp.float32, -lim, lim)
        return w, b

    w1, b1 = linear(ks[0], ks[1], d_in, h_enc)
    w2, b2 = linear(ks[2], ks[3], h_enc, d_lat)
    w3, b3 = linear(ks[4], ks[5], d_lat, h_pred)
    w4, b4 = linear(ks[6], ks[7], h_pred, d_out)
    return (w1, b1, w2, b2, w3, b3, w4, b4)


if __name__ == "__main__":
    # Lane-aligned small demo shapes: 512 cells, 256 genes, 128-wide hiddens,
    # 2-class drug-response output.  TB=256 -> a 2-step pipelined batch grid.
    B, D_in, H_enc, D_lat, H_pred, D_out = 512, 256, 256, 128, 128, 2

    key = jax.random.PRNGKey(0)
    k_x, k_p = jax.random.split(key)
    x = jax.random.normal(k_x, (B, D_in), jnp.float32)
    params = init_params(k_p, D_in, H_enc, D_lat, H_pred, D_out)

    # TODO(synk): the optional C_target (conditional-encode) branch is not
    # exercised; only encode(X_target) is implemented, matching C_target=None.
    y = target_model_forward(x, params, tb=256)
    y = jax.block_until_ready(y)

    # Pure-JAX reference using the same bf16-operand / f32-accumulate recipe.
    w1, b1, w2, b2, w3, b3, w4, b4 = params
    xb = x.astype(jnp.bfloat16)
    h1 = jnp.maximum(
        jnp.dot(xb, w1.astype(jnp.bfloat16), preferred_element_type=jnp.float32) + b1, 0.0
    ).astype(jnp.bfloat16)
    z = jnp.maximum(
        jnp.dot(h1, w2.astype(jnp.bfloat16), preferred_element_type=jnp.float32) + b2, 0.0
    ).astype(jnp.bfloat16)
    p1 = jnp.maximum(
        jnp.dot(z, w3.astype(jnp.bfloat16), preferred_element_type=jnp.float32) + b3, 0.0
    ).astype(jnp.bfloat16)
    y_ref = jax.nn.sigmoid(
        jnp.dot(p1, w4.astype(jnp.bfloat16), preferred_element_type=jnp.float32) + b4)

    assert y.shape == (B, D_out)
    assert jnp.allclose(y, y_ref, atol=2e-2, rtol=2e-2), "mismatch vs reference"

    print("KERNEL_OK")
</pallas_src>

<mosaic_0001>
module attributes {stable_mosaic.version = 11 : i64} {
  func.func @target_model_kernel(%arg0: i32, %arg1: memref<256x256xbf16, #tpu.memory_space<vmem>>, %arg2: memref<256x256xbf16, #tpu.memory_space<vmem>>, %arg3: memref<1x256xf32, #tpu.memory_space<vmem>>, %arg4: memref<256x128xbf16, #tpu.memory_space<vmem>>, %arg5: memref<1x128xf32, #tpu.memory_space<vmem>>, %arg6: memref<128x128xbf16, #tpu.memory_space<vmem>>, %arg7: memref<1x128xf32, #tpu.memory_space<vmem>>, %arg8: memref<128x128xbf16, #tpu.memory_space<vmem>>, %arg9: memref<1x128xf32, #tpu.memory_space<vmem>>, %arg10: memref<256x128xf32, #tpu.memory_space<vmem>>) attributes {dimension_semantics = [#tpu.dimension_semantics<parallel>], iteration_bounds = array<i64: 2>, scalar_prefetch = 0 : i64, scratch_operands = 0 : i64, tpu.core_type = #tpu.core_type<tc>, window_params = [{transform_indices = @transform_0, window_bounds = array<i64: 256, 256>}, {pipeline_mode = #tpu.pipeline_mode<synchronous>, transform_indices = @transform_1, window_bounds = array<i64: 256, 256>}, {pipeline_mode = #tpu.pipeline_mode<synchronous>, transform_indices = @transform_2, window_bounds = array<i64: 1, 256>}, {pipeline_mode = #tpu.pipeline_mode<synchronous>, transform_indices = @transform_3, window_bounds = array<i64: 256, 128>}, {pipeline_mode = #tpu.pipeline_mode<synchronous>, transform_indices = @transform_4, window_bounds = array<i64: 1, 128>}, {pipeline_mode = #tpu.pipeline_mode<synchronous>, transform_indices = @transform_5, window_bounds = array<i64: 128, 128>}, {pipeline_mode = #tpu.pipeline_mode<synchronous>, transform_indices = @transform_6, window_bounds = array<i64: 1, 128>}, {pipeline_mode = #tpu.pipeline_mode<synchronous>, transform_indices = @transform_7, window_bounds = array<i64: 128, 128>}, {pipeline_mode = #tpu.pipeline_mode<synchronous>, transform_indices = @transform_8, window_bounds = array<i64: 1, 128>}, {transform_indices = @transform_9, window_bounds = array<i64: 256, 128>}]} {
    %c0 = arith.constant 0 : index
    %c0_0 = arith.constant 0 : index
    %0 = vector.load %arg1[%c0, %c0_0] : memref<256x256xbf16, #tpu.memory_space<vmem>>, vector<256x256xbf16>
    %c0_1 = arith.constant 0 : index
    %c0_2 = arith.constant 0 : index
    %1 = vector.load %arg2[%c0_1, %c0_2] : memref<256x256xbf16, #tpu.memory_space<vmem>>, vector<256x256xbf16>
    %cst = arith.constant dense<0.000000e+00> : vector<256x256xf32>
    %2 = tpu.matmul %0, %1, %cst {dimension_numbers = #tpu.dot_dimension_numbers<[1], [0], [0], [1], [0, 0, 1, 1], [], []>} : vector<256x256xbf16>, vector<256x256xbf16>, vector<256x256xf32> -> vector<256x256xf32>
    %c0_3 = arith.constant 0 : index
    %c0_4 = arith.constant 0 : index
    %3 = vector.load %arg3[%c0_3, %c0_4] : memref<1x256xf32, #tpu.memory_space<vmem>>, vector<1x256xf32>
    %4 = vector.broadcast %3 : vector<1x256xf32> to vector<256x256xf32>
    %5 = arith.addf %2, %4 : vector<256x256xf32>
    %cst_5 = arith.constant 0.000000e+00 : f32
    %6 = vector.broadcast %cst_5 : f32 to vector<256x256xf32>
    %7 = arith.maximumf %5, %6 : vector<256x256xf32>
    %8 = arith.truncf %7 : vector<256x256xf32> to vector<256x256xbf16>
    %c0_6 = arith.constant 0 : index
    %c0_7 = arith.constant 0 : index
    %9 = vector.load %arg4[%c0_6, %c0_7] : memref<256x128xbf16, #tpu.memory_space<vmem>>, vector<256x128xbf16>
    %cst_8 = arith.constant dense<0.000000e+00> : vector<256x128xf32>
    %10 = tpu.matmul %8, %9, %cst_8 {dimension_numbers = #tpu.dot_dimension_numbers<[1], [0], [0], [1], [0, 0, 1, 1], [], []>} : vector<256x256xbf16>, vector<256x128xbf16>, vector<256x128xf32> -> vector<256x128xf32>
    %c0_9 = arith.constant 0 : index
    %c0_10 = arith.constant 0 : index
    %11 = vector.load %arg5[%c0_9, %c0_10] : memref<1x128xf32, #tpu.memory_space<vmem>>, vector<1x128xf32>
    %12 = vector.broadcast %11 : vector<1x128xf32> to vector<256x128xf32>
    %13 = arith.addf %10, %12 : vector<256x128xf32>
    %cst_11 = arith.constant 0.000000e+00 : f32
    %14 = vector.broadcast %cst_11 : f32 to vector<256x128xf32>
    %15 = arith.maximumf %13, %14 : vector<256x128xf32>
    %16 = arith.truncf %15 : vector<256x128xf32> to vector<256x128xbf16>
    %c0_12 = arith.constant 0 : index
    %c0_13 = arith.constant 0 : index
    %17 = vector.load %arg6[%c0_12, %c0_13] : memref<128x128xbf16, #tpu.memory_space<vmem>>, vector<128x128xbf16>
    %cst_14 = arith.constant dense<0.000000e+00> : vector<256x128xf32>
    %18 = tpu.matmul %16, %17, %cst_14 {dimension_numbers = #tpu.dot_dimension_numbers<[1], [0], [0], [1], [0, 0, 1, 1], [], []>} : vector<256x128xbf16>, vector<128x128xbf16>, vector<256x128xf32> -> vector<256x128xf32>
    %c0_15 = arith.constant 0 : index
    %c0_16 = arith.constant 0 : index
    %19 = vector.load %arg7[%c0_15, %c0_16] : memref<1x128xf32, #tpu.memory_space<vmem>>, vector<1x128xf32>
    %20 = vector.broadcast %19 : vector<1x128xf32> to vector<256x128xf32>
    %21 = arith.addf %18, %20 : vector<256x128xf32>
    %cst_17 = arith.constant 0.000000e+00 : f32
    %22 = vector.broadcast %cst_17 : f32 to vector<256x128xf32>
    %23 = arith.maximumf %21, %22 : vector<256x128xf32>
    %24 = arith.truncf %23 : vector<256x128xf32> to vector<256x128xbf16>
    %c0_18 = arith.constant 0 : index
    %c0_19 = arith.constant 0 : index
    %25 = vector.load %arg8[%c0_18, %c0_19] : memref<128x128xbf16, #tpu.memory_space<vmem>>, vector<128x128xbf16>
    %cst_20 = arith.constant dense<0.000000e+00> : vector<256x128xf32>
    %26 = tpu.matmul %24, %25, %cst_20 {dimension_numbers = #tpu.dot_dimension_numbers<[1], [0], [0], [1], [0, 0, 1, 1], [], []>} : vector<256x128xbf16>, vector<128x128xbf16>, vector<256x128xf32> -> vector<256x128xf32>
    %c0_21 = arith.constant 0 : index
    %c0_22 = arith.constant 0 : index
    %27 = vector.load %arg9[%c0_21, %c0_22] : memref<1x128xf32, #tpu.memory_space<vmem>>, vector<1x128xf32>
    %28 = vector.broadcast %27 : vector<1x128xf32> to vector<256x128xf32>
    %29 = arith.addf %26, %28 : vector<256x128xf32>
    %30 = arith.negf %29 : vector<256x128xf32>
    %31 = math.exp %30 : vector<256x128xf32>
    %cst_23 = arith.constant 1.000000e+00 : f32
    %32 = vector.broadcast %cst_23 : f32 to vector<256x128xf32>
    %33 = arith.addf %32, %31 : vector<256x128xf32>
    %34 = arith.divf %32, %33 : vector<256x128xf32>
    %c0_24 = arith.constant 0 : index
    %c0_25 = arith.constant 0 : index
    %35 = vector.load %arg10[%c0_24, %c0_25] : memref<256x128xf32, #tpu.memory_space<vmem>>, vector<256x128xf32>
    tpu.vector_store %arg10[%c0_24, %c0_25], %34 {strides = array<i32>} : memref<256x128xf32, #tpu.memory_space<vmem>>, vector<256x128xf32>,
    return
  }
  func.func @transform_0(%arg0: i32) -> (i32, i32) {
    %c0_i32 = arith.constant 0 : i32
    %c0_i32_0 = arith.constant 0 : i32
    return %arg0, %c0_i32 : i32, i32
  }
  func.func @transform_1(%arg0: i32) -> (i32, i32) {
    %c0_i32 = arith.constant 0 : i32
    %c0_i32_0 = arith.constant 0 : i32
    %c0_i32_1 = arith.constant 0 : i32
    return %c0_i32, %c0_i32_0 : i32, i32
  }
  func.func @transform_2(%arg0: i32) -> (i32, i32) {
    %c0_i32 = arith.constant 0 : i32
    %c0_i32_0 = arith.constant 0 : i32
    %c0_i32_1 = arith.constant 0 : i32
    return %c0_i32, %c0_i32_0 : i32, i32
  }
  func.func @transform_3(%arg0: i32) -> (i32, i32) {
    %c0_i32 = arith.constant 0 : i32
    %c0_i32_0 = arith.constant 0 : i32
    %c0_i32_1 = arith.constant 0 : i32
    return %c0_i32, %c0_i32_0 : i32, i32
  }
  func.func @transform_4(%arg0: i32) -> (i32, i32) {
    %c0_i32 = arith.constant 0 : i32
    %c0_i32_0 = arith.constant 0 : i32
    %c0_i32_1 = arith.constant 0 : i32
    return %c0_i32, %c0_i32_0 : i32, i32
  }
  func.func @transform_5(%arg0: i32) -> (i32, i32) {
    %c0_i32 = arith.constant 0 : i32
    %c0_i32_0 = arith.constant 0 : i32
    %c0_i32_1 = arith.constant 0 : i32
    return %c0_i32, %c0_i32_0 : i32, i32
  }
  func.func @transform_6(%arg0: i32) -> (i32, i32) {
    %c0_i32 = arith.constant 0 : i32
    %c0_i32_0 = arith.constant 0 : i32
    %c0_i32_1 = arith.constant 0 : i32
    return %c0_i32, %c0_i32_0 : i32, i32
  }
  func.func @transform_7(%arg0: i32) -> (i32, i32) {
    %c0_i32 = arith.constant 0 : i32
    %c0_i32_0 = arith.constant 0 : i32
    %c0_i32_1 = arith.constant 0 : i32
    return %c0_i32, %c0_i32_0 : i32, i32
  }
  func.func @transform_8(%arg0: i32) -> (i32, i32) {
    %c0_i32 = arith.constant 0 : i32
    %c0_i32_0 = arith.constant 0 : i32
    %c0_i32_1 = arith.constant 0 : i32
    return %c0_i32, %c0_i32_0 : i32, i32
  }
  func.func @transform_9(%arg0: i32) -> (i32, i32) {
    %c0_i32 = arith.constant 0 : i32
    %c0_i32_0 = arith.constant 0 : i32
    return %arg0, %c0_i32 : i32, i32
  }
}

</mosaic_0001>

<llo_original>
// kernel: tpu_custom_call.1
$region0: #{tpu_custom_call.1}
  #allocation0 [shape = 'u32[]', space=smem, size = 0x4, offset = 0x4, fixed_abs, tag = 'smem constant byte address 0x4 - core index']
  #allocation1 [shape = 'u32[144,128]{1,0:T(1,128)}', space=vmem, size = 0x12000, scoped, tag = 'internal scratch']
  %s0 = inlined_call_operand.hbm [shape: bf16[512,256], index: 0, kind: input, shape index: {}]
  %s1 = inlined_call_operand.hbm [shape: bf16[256,256], index: 1, kind: input, shape index: {}]
  %s2 = inlined_call_operand.vmem [shape: f32[1,256], index: 2, kind: input, shape index: {}]
  %s3 = inlined_call_operand.hbm [shape: bf16[256,128], index: 3, kind: input, shape index: {}]
  %s4 = inlined_call_operand.vmem [shape: f32[1,128], index: 4, kind: input, shape index: {}]
  %s5 = inlined_call_operand.hbm [shape: bf16[128,128], index: 5, kind: input, shape index: {}]
  %s6 = inlined_call_operand.vmem [shape: f32[1,128], index: 6, kind: input, shape index: {}]
  %s7 = inlined_call_operand.hbm [shape: bf16[128,128], index: 7, kind: input, shape index: {}]
  %s8 = inlined_call_operand.vmem [shape: f32[1,128], index: 8, kind: input, shape index: {}]
  %s9 = inlined_call_operand.hbm [shape: f32[512,128], index: 9, kind: output, shape index: {}]
  %s10 = sld [smem:[#allocation0]]
  $region89: #{tpu_custom_call.1} parent=0
    _
  %s12 = ssub.s32 1, %s10
  %s13 = scalar_select 0, %s12, %s10
  $region1: #{tpu_custom_call.1} parent=0
    #allocation2 [shape = 'u8[262144]{0}', space=vmem, size = 0x40000, scoped, tag = 'input window, operand 0']
    #allocation3 [shape = 's32[2]{0}', space=sflag, size = 0x8, scoped, tag = 'scoped memory for tpu_custom_call.1']
    #allocation4 [shape = 's32[2]{0}', space=sflag, size = 0x8, scoped, tag = 'scoped memory for tpu_custom_call.1']
    #allocation5 [shape = 'u8[131072]{0}', space=vmem, size = 0x20000, scoped, tag = 'input window, operand 1, single buffered']
    #allocation6 [shape = 's32[1]{0}', space=sflag, size = 0x4, scoped, tag = 'scoped memory for tpu_custom_call.1']
    #allocation7 [shape = 'u8[65536]{0}', space=vmem, size = 0x10000, scoped, tag = 'input window, operand 3, single buffered']
    #allocation8 [shape = 'u8[32768]{0}', space=vmem, size = 0x8000, scoped, tag = 'input window, operand 5, single buffered']
    #allocation9 [shape = 's32[1]{0}', space=sflag, size = 0x4, scoped, tag = 'scoped memory for tpu_custom_call.1']
    #allocation10 [shape = 'u8[32768]{0}', space=vmem, size = 0x8000, scoped, tag = 'input window, operand 7, single buffered']
    #allocation11 [shape = 'u8[262144]{0}', space=vmem, size = 0x40000, scoped, tag = 'output window, operand 0']
    %14 = vsyncpa [#allocation3], 0
    %s15 = scalar_lea.sflag [#allocation3], 1
    %16 = vsyncpa %s15, 0
    %17 = vsyncpa [#allocation6], 0
    %18 = vsyncpa [#allocation9], 0
    %19 = vsyncpa [#allocation4], 0
    %s20 = scalar_lea.sflag [#allocation4], 1
    %21 = vsyncpa %s20, 0
    loop: start=0, step=1, limit=4
    $region2: #{tpu_custom_call.1} parent=1 // loop_pre_header
      _
    $region3: #{tpu_custom_call.1} parent=1 // loop_header
      %s23 = sphi 0, %s27
      %p24 = scmp.ge.s32.totalorder %s23, 4
      %s33 = sphi 0, %s35
      %s36 = sphi 0, %s33
      %s37 = sphi 0, %s36
      %s53 = sphi 0, %s37
      %s57 = sphi 0, %s57
      %s59 = sphi 0, %s57
      %s60 = sphi 0, %s59
      %s74 = sphi 0, %s60
      %s78 = sphi 0, %s78
      %s80 = sphi 0, %s78
      %s81 = sphi 0, %s80
      %s95 = sphi 0, %s81
      %s99 = sphi 0, %s99
      %s101 = sphi 0, %s99
      %s102 = sphi 0, %s101
      %s116 = sphi 0, %s102
      %s120 = sphi 0, %s120
      %s122 = sphi 0, %s120
      %s123 = sphi 0, %s122
      %s137 = sphi 0, %s123
      %s141 = sphi 0, %s141
      %s143 = sphi 0, %s141
      %s144 = sphi 0, %s143
      %s158 = sphi 0, %s144
      %s162 = sphi 0, %s162
      %s164 = sphi 0, %s162
      %s165 = sphi 0, %s164
      %s179 = sphi 0, %s165
      %s183 = sphi 0, %s183
      %s185 = sphi 0, %s183
      %s186 = sphi 0, %s185
      %s200 = sphi 0, %s186
      %s204 = sphi 0, %s204
      %s206 = sphi 0, %s204
      %s207 = sphi 0, %s206
      %s221 = sphi 0, %s207
      %s227 = sphi 0, %s229
      %s230 = sphi 0, %s227
      %s231 = sphi 0, %s230
      %s247 = sphi 0, %s231
    $region4: #{tpu_custom_call.1} parent=1 // loop_header_branch
      %26 = sbr.rel (%p24) target = $region8
    $region5: #{tpu_custom_call.1} parent=1 // loop_body
      %s28 = ssub.s32 %s23, 1
      %s29 = ssub.s32 %s23, 2
      %s30 = sadd.s32 %s23, 1
      %s31 = ssub.s32 %s23, %s30
      %p32 = scmp.eq.s32.totalorder %s31, 0
      %s34 = sadd.s32 %s33, 1
      %s35 = scalar_select %p32, %s33, %s34
      %p38 = pneg %p32
      %p39 = scmp.eq.s32.totalorder %s23, 1
      %p40 = por %p38, %p39
      %p41 = scmp.ne.s32.totalorder %s33, %s36
      %p42 = scmp.eq.s32.totalorder %s23, 0
      %p43 = por %p41, %p42
      %p44 = scmp.ne.s32.totalorder %s33, %s36
      %p45 = scmp.eq.s32.totalorder %s28, 1
      %p46 = por %p44, %p45
      %p47 = scmp.ne.s32.totalorder %s36, %s37
      %p48 = scmp.eq.s32.totalorder %s28, 0
      %p49 = por %p47, %p48
      %p50 = scmp.ne.s32.totalorder %s36, %s37
      %p51 = scmp.eq.s32.totalorder %s29, 1
      %p52 = por %p50, %p51
      %p54 = scmp.ne.s32.totalorder %s37, %s53
      %p55 = scmp.eq.s32.totalorder %s29, 0
      %p56 = por %p54, %p55
      %s58 = sadd.s32 %s57, 1
      %p61 = scmp.eq.s32.totalorder %s23, 1
      %p62 = scmp.ne.s32.totalorder %s57, %s59
      %p63 = scmp.eq.s32.totalorder %s23, 0
      %p64 = por %p62, %p63
      %p65 = scmp.ne.s32.totalorder %s57, %s59
      %p66 = scmp.eq.s32.totalorder %s28, 1
      %p67 = por %p65, %p66
      %p68 = scmp.ne.s32.totalorder %s59, %s60
      %p69 = scmp.eq.s32.totalorder %s28, 0
      %p70 = por %p68, %p69
      %p71 = scmp.ne.s32.totalorder %s59, %s60
      %p72 = scmp.eq.s32.totalorder %s29, 1
      %p73 = por %p71, %p72
      %p75 = scmp.ne.s32.totalorder %s60, %s74
      %p76 = scmp.eq.s32.totalorder %s29, 0
      %p77 = por %p75, %p76
      %s79 = sadd.s32 %s78, 1
      %p82 = scmp.eq.s32.totalorder %s23, 1
      %p83 = scmp.ne.s32.totalorder %s78, %s80
      %p84 = scmp.eq.s32.totalorder %s23, 0
      %p85 = por %p83, %p84
      %p86 = scmp.ne.s32.totalorder %s78, %s80
      %p87 = scmp.eq.s32.totalorder %s28, 1
      %p88 = por %p86, %p87
      %p89 = scmp.ne.s32.totalorder %s80, %s81
      %p90 = scmp.eq.s32.totalorder %s28, 0
      %p91 = por %p89, %p90
      %p92 = scmp.ne.s32.totalorder %s80, %s81
      %p93 = scmp.eq.s32.totalorder %s29, 1
      %p94 = por %p92, %p93
      %p96 = scmp.ne.s32.totalorder %s81, %s95
      %p97 = scmp.eq.s32.totalorder %s29, 0
      %p98 = por %p96, %p97
      %s100 = sadd.s32 %s99, 1
      %p103 = scmp.eq.s32.totalorder %s23, 1
      %p104 = scmp.ne.s32.totalorder %s99, %s101
      %p105 = scmp.eq.s32.totalorder %s23, 0
      %p106 = por %p104, %p105
      %p107 = scmp.ne.s32.totalorder %s99, %s101
      %p108 = scmp.eq.s32.totalorder %s28, 1
      %p109 = por %p107, %p108
      %p110 = scmp.ne.s32.totalorder %s101, %s102
      %p111 = scmp.eq.s32.totalorder %s28, 0
      %p112 = por %p110, %p111
      %p113 = scmp.ne.s32.totalorder %s101, %s102
      %p114 = scmp.eq.s32.totalorder %s29, 1
      %p115 = por %p113, %p114
      %p117 = scmp.ne.s32.totalorder %s102, %s116
      %p118 = scmp.eq.s32.totalorder %s29, 0
      %p119 = por %p117, %p118
      %s121 = sadd.s32 %s120, 1
      %p124 = scmp.eq.s32.totalorder %s23, 1
      %p125 = scmp.ne.s32.totalorder %s120, %s122
      %p126 = scmp.eq.s32.totalorder %s23, 0
      %p127 = por %p125, %p126
      %p128 = scmp.ne.s32.totalorder %s120, %s122
      %p129 = scmp.eq.s32.totalorder %s28, 1
      %p130 = por %p128, %p129
      %p131 = scmp.ne.s32.totalorder %s122, %s123
      %p132 = scmp.eq.s32.totalorder %s28, 0
      %p133 = por %p131, %p132
      %p134 = scmp.ne.s32.totalorder %s122, %s123
      %p135 = scmp.eq.s32.totalorder %s29, 1
      %p136 = por %p134, %p135
      %p138 = scmp.ne.s32.totalorder %s123, %s137
      %p139 = scmp.eq.s32.totalorder %s29, 0
      %p140 = por %p138, %p139
      %s142 = sadd.s32 %s141, 1
      %p145 = scmp.eq.s32.totalorder %s23, 1
      %p146 = scmp.ne.s32.totalorder %s141, %s143
      %p147 = scmp.eq.s32.totalorder %s23, 0
      %p148 = por %p146, %p147
      %p149 = scmp.ne.s32.totalorder %s141, %s143
      %p150 = scmp.eq.s32.totalorder %s28, 1
      %p151 = por %p149, %p150
      %p152 = scmp.ne.s32.totalorder %s143, %s144
      %p153 = scmp.eq.s32.totalorder %s28, 0
      %p154 = por %p152, %p153
      %p155 = scmp.ne.s32.totalorder %s143, %s144
      %p156 = scmp.eq.s32.totalorder %s29, 1
      %p157 = por %p155, %p156
      %p159 = scmp.ne.s32.totalorder %s144, %s158
      %p160 = scmp.eq.s32.totalorder %s29, 0
      %p161 = por %p159, %p160
      %s163 = sadd.s32 %s162, 1
      %p166 = scmp.eq.s32.totalorder %s23, 1
      %p167 = scmp.ne.s32.totalorder %s162, %s164
      %p168 = scmp.eq.s32.totalorder %s23, 0
      %p169 = por %p167, %p168
      %p170 = scmp.ne.s32.totalorder %s162, %s164
      %p171 = scmp.eq.s32.totalorder %s28, 1
      %p172 = por %p170, %p171
      %p173 = scmp.ne.s32.totalorder %s164, %s165
      %p174 = scmp.eq.s32.totalorder %s28, 0
      %p175 = por %p173, %p174
      %p176 = scmp.ne.s32.totalorder %s164, %s165
      %p177 = scmp.eq.s32.totalorder %s29, 1
      %p178 = por %p176, %p177
      %p180 = scmp.ne.s32.totalorder %s165, %s179
      %p181 = scmp.eq.s32.totalorder %s29, 0
      %p182 = por %p180, %p181
      %s184 = sadd.s32 %s183, 1
      %p187 = scmp.eq.s32.totalorder %s23, 1
      %p188 = scmp.ne.s32.totalorder %s183, %s185
      %p189 = scmp.eq.s32.totalorder %s23, 0
      %p190 = por %p188, %p189
      %p191 = scmp.ne.s32.totalorder %s183, %s185
      %p192 = scmp.eq.s32.totalorder %s28, 1
      %p193 = por %p191, %p192
      %p194 = scmp.ne.s32.totalorder %s185, %s186
      %p195 = scmp.eq.s32.totalorder %s28, 0
      %p196 = por %p194, %p195
      %p197 = scmp.ne.s32.totalorder %s185, %s186
      %p198 = scmp.eq.s32.totalorder %s29, 1
      %p199 = por %p197, %p198
      %p201 = scmp.ne.s32.totalorder %s186, %s200
      %p202 = scmp.eq.s32.totalorder %s29, 0
      %p203 = por %p201, %p202
      %s205 = sadd.s32 %s204, 1
      %p208 = scmp.eq.s32.totalorder %s23, 1
      %p209 = scmp.ne.s32.totalorder %s204, %s206
      %p210 = scmp.eq.s32.totalorder %s23, 0
      %p211 = por %p209, %p210
      %p212 = scmp.ne.s32.totalorder %s204, %s206
      %p213 = scmp.eq.s32.totalorder %s28, 1
      %p214 = por %p212, %p213
      %p215 = scmp.ne.s32.totalorder %s206, %s207
      %p216 = scmp.eq.s32.totalorder %s28, 0
      %p217 = por %p215, %p216
      %p218 = scmp.ne.s32.totalorder %s206, %s207
      %p219 = scmp.eq.s32.totalorder %s29, 1
      %p220 = por %p218, %p219
      %p222 = scmp.ne.s32.totalorder %s207, %s221
      %p223 = scmp.eq.s32.totalorder %s29, 0
      %p224 = por %p222, %p223
      %s225 = ssub.s32 %s23, %s30
      %p226 = scmp.eq.s32.totalorder %s225, 0
      %s228 = sadd.s32 %s227, 1
      %s229 = scalar_select %p226, %s227, %s228
      %p232 = pneg %p226
      %p233 = scmp.eq.s32.totalorder %s23, 1
      %p234 = por %p232, %p233
      %p235 = scmp.ne.s32.totalorder %s227, %s230
      %p236 = scmp.eq.s32.totalorder %s23, 0
      %p237 = por %p235, %p236
      %p238 = scmp.ne.s32.totalorder %s227, %s230
      %p239 = scmp.eq.s32.totalorder %s28, 1
      %p240 = por %p238, %p239
      %p241 = scmp.ne.s32.totalorder %s230, %s231
      %p242 = scmp.eq.s32.totalorder %s28, 0
      %p243 = por %p241, %p242
      %p244 = scmp.ne.s32.totalorder %s230, %s231
      %p245 = scmp.eq.s32.totalorder %s29, 1
      %p246 = por %p244, %p245
      %p248 = scmp.ne.s32.totalorder %s231, %s247
      %p249 = scmp.eq.s32.totalorder %s29, 0
      %p250 = por %p248, %p249
      %p251 = scmp.le.s32.totalorder 1, %s23
      %p252 = scmp.lt.s32.totalorder %s23, 3
      %p253 = pnand %p251, %p252
      %p254 = pneg %p253
      // Predicated region
      $region9: #{tpu_custom_call.1} parent=5 // pred_check
        _
      $region10: #{tpu_custom_call.1} parent=5 // pred_check_branch
        %256 = sbr.rel (%p253) target = $region12
      $region11: #{tpu_custom_call.1} parent=5 // pred_region
        %s257 = ssub.s32 %s23, 1
        // Predicated region
        $region13: #{tpu_custom_call.1} parent=11 // pred_check
          %p258 = pneg %p70
        $region14: #{tpu_custom_call.1} parent=11 // pred_check_branch
          %260 = sbr.rel (%p258) target = $region16
        $region15: #{tpu_custom_call.1} parent=11 // pred_region
          %s262 = ssub.s32 4096, 4096
          %263 = vsyncadd [#allocation6], %s262
          %s264 = sshll.u32 [#allocation5], 4
          %s265 = int_to_ptr.vmem [resolvable:$true] %s264
          %270 = dma.hbm_to_vmem [thread:$0]  %s1, 4096, %s265, [#allocation6], 128, 128, 8
        $region16: #{tpu_custom_call.1} parent=11 // pred_fallthru
          _
        // Predicated region
        $region17: #{tpu_custom_call.1} parent=11 // pred_check
          %p271 = pneg %p91
        $region18: #{tpu_custom_call.1} parent=11 // pred_check_branch
          %273 = sbr.rel (%p271) target = $region20
        $region19: #{tpu_custom_call.1} parent=11 // pred_region
          _
        $region20: #{tpu_custom_call.1} parent=11 // pred_fallthru
          _
        // Predicated region
        $region21: #{tpu_custom_call.1} parent=11 // pred_check
          %p274 = pneg %p112
        $region22: #{tpu_custom_call.1} parent=11 // pred_check_branch
          %276 = sbr.rel (%p274) target = $region24
        $region23: #{tpu_custom_call.1} parent=11 // pred_region
          %s278 = ssub.s32 2048, 2048
          %279 = vsyncadd [#allocation6], %s278
          %s280 = sshll.u32 [#allocation7], 4
          %s281 = int_to_ptr.vmem [resolvable:$true] %s280
          %286 = dma.hbm_to_vmem [thread:$0]  %s3, 2048, %s281, [#allocation6], 64, 64, 4
        $region24: #{tpu_custom_call.1} parent=11 // pred_fallthru
          _
        // Predicated region
        $region25: #{tpu_custom_call.1} parent=11 // pred_check
          %p287 = pneg %p133
        $region26: #{tpu_custom_call.1} parent=11 // pred_check_branch
          %289 = sbr.rel (%p287) target = $region28
        $region27: #{tpu_custom_call.1} parent=11 // pred_region
          _
        $region28: #{tpu_custom_call.1} parent=11 // pred_fallthru
          _
        // Predicated region
        $region29: #{tpu_custom_call.1} parent=11 // pred_check
          %p290 = pneg %p154
        $region30: #{tpu_custom_call.1} parent=11 // pred_check_branch
          %292 = sbr.rel (%p290) target = $region32
        $region31: #{tpu_custom_call.1} parent=11 // pred_region
          %s294 = ssub.s32 1024, 1024
          %295 = vsyncadd [#allocation9], %s294
          %s296 = sshll.u32 [#allocation8], 4
          %s297 = int_to_ptr.vmem [resolvable:$true] %s296
          %302 = dma.hbm_to_vmem [thread:$0]  %s5, 1024, %s297, [#allocation9], 64, 64, 4
        $region32: #{tpu_custom_call.1} parent=11 // pred_fallthru
          _
        // Predicated region
        $region33: #{tpu_custom_call.1} parent=11 // pred_check
          %p303 = pneg %p175
        $region34: #{tpu_custom_call.1} parent=11 // pred_check_branch
          %305 = sbr.rel (%p303) target = $region36
        $region35: #{tpu_custom_call.1} parent=11 // pred_region
          _
        $region36: #{tpu_custom_call.1} parent=11 // pred_fallthru
          _
        // Predicated region
        $region37: #{tpu_custom_call.1} parent=11 // pred_check
          %p306 = pneg %p196
        $region38: #{tpu_custom_call.1} parent=11 // pred_check_branch
          %308 = sbr.rel (%p306) target = $region40
        $region39: #{tpu_custom_call.1} parent=11 // pred_region
          %s310 = ssub.s32 1024, 1024
          %311 = vsyncadd [#allocation9], %s310
          %s312 = sshll.u32 [#allocation10], 4
          %s313 = int_to_ptr.vmem [resolvable:$true] %s312
          %318 = dma.hbm_to_vmem [thread:$0]  %s7, 1024, %s313, [#allocation9], 64, 64, 4
        $region40: #{tpu_custom_call.1} parent=11 // pred_fallthru
          _
        // Predicated region
        $region41: #{tpu_custom_call.1} parent=11 // pred_check
          %p319 = pneg %p217
        $region42: #{tpu_custom_call.1} parent=11 // pred_check_branch
          %321 = sbr.rel (%p319) target = $region44
        $region43: #{tpu_custom_call.1} parent=11 // pred_region
          _
        $region44: #{tpu_custom_call.1} parent=11 // pred_fallthru
          _
      $region12: #{tpu_custom_call.1} parent=5 // pred_fallthru
        _
      %p322 = scmp.lt.s32.totalorder %s23, 2
      // Predicated region
      $region45: #{tpu_custom_call.1} parent=5 // pred_check
        %p323 = pneg %p322
      $region46: #{tpu_custom_call.1} parent=5 // pred_check_branch
        %325 = sbr.rel (%p323) target = $region48
      $region47: #{tpu_custom_call.1} parent=5 // pred_region
        // Predicated region
        $region49: #{tpu_custom_call.1} parent=47 // pred_check
          %p326 = pneg %p43
        $region50: #{tpu_custom_call.1} parent=47 // pred_check_branch
          %328 = sbr.rel (%p326) target = $region52
        $region51: #{tpu_custom_call.1} parent=47 // pred_region
          %s329 = sand.u32 %s33, 1
          %s330 = scalar_lea.sflag [#allocation3], %s329
          %s331 = sand.u32 %s33, 1
          %s332 = smul.addr %s331, 256
          %s333 = scalar_lea.vmem [#allocation2], %s332
          %s334 = smul.u32 32, %s23
          %s336 = ssub.s32 4096, 4096
          %337 = vsyncadd %s330, %s336
          %s338 = smul.addr %s334, 2
          %s339 = smul.addr %s338, 64
          %s340 = scalar_lea.hbm %s0, %s339
          %s341 = sshll.u32 %s333, 4
          %s342 = int_to_ptr.vmem [resolvable:$true] %s341
          %347 = dma.hbm_to_vmem [thread:$0]  %s340, 4096, %s342, %s330, 128, 128, 8
        $region52: #{tpu_custom_call.1} parent=47 // pred_fallthru
          _
      $region48: #{tpu_custom_call.1} parent=5 // pred_fallthru
        _
      %p348 = scmp.le.s32.totalorder 1, %s23
      %p349 = scmp.lt.s32.totalorder %s23, 3
      %p350 = pnand %p348, %p349
      %p351 = pneg %p350
      // Predicated region
      $region53: #{tpu_custom_call.1} parent=5 // pred_check
        _
      $region54: #{tpu_custom_call.1} parent=5 // pred_check_branch
        %353 = sbr.rel (%p350) target = $region56
      $region55: #{tpu_custom_call.1} parent=5 // pred_region
        %s354 = ssub.s32 %s23, 1
        %s355 = sand.u32 %s36, 1
        %s356 = scalar_lea.sflag [#allocation3], %s355
        %s357 = sand.u32 %s36, 1
        %s358 = smul.addr %s357, 256
        %s359 = scalar_lea.vmem [#allocation2], %s358
        // Predicated region
        $region57: #{tpu_custom_call.1} parent=55 // pred_check
          %p360 = pneg %p49
        $region58: #{tpu_custom_call.1} parent=55 // pred_check_branch
          %362 = sbr.rel (%p360) target = $region60
        $region59: #{tpu_custom_call.1} parent=55 // pred_region
          %363 = dma.done %s356, 4096
        $region60: #{tpu_custom_call.1} parent=55 // pred_fallthru
          _
        // Predicated region
        $region61: #{tpu_custom_call.1} parent=55 // pred_check
          %p364 = pneg %p70
        $region62: #{tpu_custom_call.1} parent=55 // pred_check_branch
          %366 = sbr.rel (%p364) target = $region64
        $region63: #{tpu_custom_call.1} parent=55 // pred_region
          %367 = dma.done [#allocation6], 4096
        $region64: #{tpu_custom_call.1} parent=55 // pred_fallthru
          _
        // Predicated region
        $region65: #{tpu_custom_call.1} parent=55 // pred_check
          %p368 = pneg %p112
        $region66: #{tpu_custom_call.1} parent=55 // pred_check_branch
          %370 = sbr.rel (%p368) target = $region68
        $region67: #{tpu_custom_call.1} parent=55 // pred_region
          %371 = dma.done [#allocation6], 2048
        $region68: #{tpu_custom_call.1} parent=55 // pred_fallthru
          _
        // Predicated region
        $region69: #{tpu_custom_call.1} parent=55 // pred_check
          %p372 = pneg %p154
        $region70: #{tpu_custom_call.1} parent=55 // pred_check_branch
          %374 = sbr.rel (%p372) target = $region72
        $region71: #{tpu_custom_call.1} parent=55 // pred_region
          %375 = dma.done [#allocation9], 1024
        $region72: #{tpu_custom_call.1} parent=55 // pred_fallthru
          _
        // Predicated region
        $region73: #{tpu_custom_call.1} parent=55 // pred_check
          %p376 = pneg %p196
        $region74: #{tpu_custom_call.1} parent=55 // pred_check_branch
          %378 = sbr.rel (%p376) target = $region76
        $region75: #{tpu_custom_call.1} parent=55 // pred_region
          %379 = dma.done [#allocation9], 1024
        $region76: #{tpu_custom_call.1} parent=55 // pred_fallthru
          _
        %s380 = sand.u32 %s36, 1
        %s381 = scalar_lea.sflag [#allocation3], %s380
        %s382 = sand.u32 %s36, 1
        %s383 = smul.addr %s382, 256
        %s384 = scalar_lea.vmem [#allocation2], %s383
        %p385 = pneg %p49
        %p386 = pneg %p46
        %p387 = pneg %p70
        %p388 = pneg %p67
        %p389 = pneg %p91
        %p390 = pneg %p88
        %p391 = pneg %p112
        %p392 = pneg %p109
        %p393 = pneg %p133
        %p394 = pneg %p130
        %p395 = pneg %p154
        %p396 = pneg %p151
        %p397 = pneg %p175
        %p398 = pneg %p172
        %p399 = pneg %p196
        %p400 = pneg %p193
        %p401 = pneg %p217
        %p402 = pneg %p214
        %p403 = pneg %p243
        %p404 = pneg %p240
        %s405 = sand.u32 %s230, 1
        %s406 = scalar_lea.sflag [#allocation4], %s405
        %s407 = sand.u32 %s230, 1
        %s408 = smul.addr %s407, 256
        %s409 = scalar_lea.vmem [#allocation11], %s408
        %s410 = smul.u32 32, %s28
        %s411 = smul.u32 32, %s28
        %v413 = vld [vmem:[%s359] sm:$0xff]
        %v414 = vld [vmem:[%s359 + $0x8] sm:$0xff]
        %v415 = vld [vmem:[%s359 + $0x10] sm:$0xff]
        %v416 = vld [vmem:[%s359 + $0x18] sm:$0xff]
        %v417 = vld [vmem:[%s359 + $0x20] sm:$0xff]
        %v418 = vld [vmem:[%s359 + $0x28] sm:$0xff]
        %v419 = vld [vmem:[%s359 + $0x30] sm:$0xff]
        %v420 = vld [vmem:[%s359 + $0x38] sm:$0xff]
        %v421 = vld [vmem:[%s359 + $0x40] sm:$0xff]
        %v422 = vld [vmem:[%s359 + $0x48] sm:$0xff]
        %v423 = vld [vmem:[%s359 + $0x50] sm:$0xff]
        %v424 = vld [vmem:[%s359 + $0x58] sm:$0xff]
        %v425 = vld [vmem:[%s359 + $0x60] sm:$0xff]
        %v426 = vld [vmem:[%s359 + $0x68] sm:$0xff]
        %v427 = vld [vmem:[%s359 + $0x70] sm:$0xff]
        %v428 = vld [vmem:[%s359 + $0x78] sm:$0xff]
        %v429 = vld [vmem:[%s359 + $0x80] sm:$0xff]
        %v430 = vld [vmem:[%s359 + $0x88] sm:$0xff]
        %v431 = vld [vmem:[%s359 + $0x90] sm:$0xff]
        %v432 = vld [vmem:[%s359 + $0x98] sm:$0xff]
        %v433 = vld [vmem:[%s359 + $0xa0] sm:$0xff]
        %v434 = vld [vmem:[%s359 + $0xa8] sm:$0xff]
        %v435 = vld [vmem:[%s359 + $0xb0] sm:$0xff]
        %v436 = vld [vmem:[%s359 + $0xb8] sm:$0xff]
        %v437 = vld [vmem:[%s359 + $0xc0] sm:$0xff]
        %v438 = vld [vmem:[%s359 + $0xc8] sm:$0xff]
        %v439 = vld [vmem:[%s359 + $0xd0] sm:$0xff]
        %v440 = vld [vmem:[%s359 + $0xd8] sm:$0xff]
        %v441 = vld [vmem:[%s359 + $0xe0] sm:$0xff]
        %v442 = vld [vmem:[%s359 + $0xe8] sm:$0xff]
        %v443 = vld [vmem:[%s359 + $0xf0] sm:$0xff]
        %v444 = vld [vmem:[%s359 + $0xf8] sm:$0xff]
        %v445 = vld [vmem:[#allocation5] sm:$0xff]
        %v446 = vld [vmem:[#allocation5 + $0x8] sm:$0xff]
        %v447 = vld [vmem:[#allocation5 + $0x10] sm:$0xff]
        %v448 = vld [vmem:[#allocation5 + $0x18] sm:$0xff]
        %v449 = vld [vmem:[#allocation5 + $0x20] sm:$0xff]
        %v450 = vld [vmem:[#allocation5 + $0x28] sm:$0xff]
        %v451 = vld [vmem:[#allocation5 + $0x30] sm:$0xff]
        %v452 = vld [vmem:[#allocation5 + $0x38] sm:$0xff]
        %v453 = vld [vmem:[#allocation5 + $0x40] sm:$0xff]
        %v454 = vld [vmem:[#allocation5 + $0x48] sm:$0xff]
        %v455 = vld [vmem:[#allocation5 + $0x50] sm:$0xff]
        %v456 = vld [vmem:[#allocation5 + $0x58] sm:$0xff]
        %v457 = vld [vmem:[#allocation5 + $0x60] sm:$0xff]
        %v458 = vld [vmem:[#allocation5 + $0x68] sm:$0xff]
        %v459 = vld [vmem:[#allocation5 + $0x70] sm:$0xff]
        %v460 = vld [vmem:[#allocation5 + $0x78] sm:$0xff]
        %v461 = vld [vmem:[#allocation5 + $0x80] sm:$0xff]
        %v462 = vld [vmem:[#allocation5 + $0x88] sm:$0xff]
        %v463 = vld [vmem:[#allocation5 + $0x90] sm:$0xff]
        %v464 = vld [vmem:[#allocation5 + $0x98] sm:$0xff]
        %v465 = vld [vmem:[#allocation5 + $0xa0] sm:$0xff]
        %v466 = vld [vmem:[#allocation5 + $0xa8] sm:$0xff]
        %v467 = vld [vmem:[#allocation5 + $0xb0] sm:$0xff]
        %v468 = vld [vmem:[#allocation5 + $0xb8] sm:$0xff]
        %v469 = vld [vmem:[#allocation5 + $0xc0] sm:$0xff]
        %v470 = vld [vmem:[#allocation5 + $0xc8] sm:$0xff]
        %v471 = vld [vmem:[#allocation5 + $0xd0] sm:$0xff]
        %v472 = vld [vmem:[#allocation5 + $0xd8] sm:$0xff]
        %v473 = vld [vmem:[#allocation5 + $0xe0] sm:$0xff]
        %v474 = vld [vmem:[#allocation5 + $0xe8] sm:$0xff]
        %v475 = vld [vmem:[#allocation5 + $0xf0] sm:$0xff]
        %v476 = vld [vmem:[#allocation5 + $0xf8] sm:$0xff]
        %v477 = vld [vmem:[%s2] sm:$0x3]
        %v479 = vlaneseq
        %v480 = vshrl.u32 %v479, 7
        %v481 = vsub.s32 0, %v480
        %v482 = vrot.slane %v477, %v481
        %v483 = vlaneseq
        %v484 = vshrl.u32 %v483, 7
        %v485 = vsub.s32 1, %v484
        %v486 = vrot.slane %v477, %v485
        %v521 = vunpack.c.l.b16 %v413
        %v522 = vunpack.c.h.b16 %v413
        %v523 = vunpack.c.l.b16 %v414
        %v524 = vunpack.c.h.b16 %v414
        %v525 = vunpack.c.l.b16 %v415
        %v526 = vunpack.c.h.b16 %v415
        %v527 = vunpack.c.l.b16 %v416
        %v528 = vunpack.c.h.b16 %v416
        %v529 = vunpack.c.l.b16 %v417
        %v530 = vunpack.c.h.b16 %v417
        %v531 = vunpack.c.l.b16 %v418
        %v532 = vunpack.c.h.b16 %v418
        %v533 = vunpack.c.l.b16 %v419
        %v534 = vunpack.c.h.b16 %v419
        %v535 = vunpack.c.l.b16 %v420
        %v536 = vunpack.c.h.b16 %v420
        %v537 = vunpack.c.l.b16 %v421
        %v538 = vunpack.c.h.b16 %v421
        %v539 = vunpack.c.l.b16 %v422
        %v540 = vunpack.c.h.b16 %v422
        %v541 = vunpack.c.l.b16 %v423
        %v542 = vunpack.c.h.b16 %v423
        %v543 = vunpack.c.l.b16 %v424
        %v544 = vunpack.c.h.b16 %v424
        %v545 = vunpack.c.l.b16 %v425
        %v546 = vunpack.c.h.b16 %v425
        %v547 = vunpack.c.l.b16 %v426
        %v548 = vunpack.c.h.b16 %v426
        %v549 = vunpack.c.l.b16 %v427
        %v550 = vunpack.c.h.b16 %v427
        %v551 = vunpack.c.l.b16 %v428
        %v552 = vunpack.c.h.b16 %v428
        %v553 = vunpack.c.l.b16 %v429
        %v554 = vunpack.c.h.b16 %v429
        %v555 = vunpack.c.l.b16 %v430
        %v556 = vunpack.c.h.b16 %v430
        %v557 = vunpack.c.l.b16 %v431
        %v558 = vunpack.c.h.b16 %v431
        %v559 = vunpack.c.l.b16 %v432
        %v560 = vunpack.c.h.b16 %v432
        %v561 = vunpack.c.l.b16 %v433
        %v562 = vunpack.c.h.b16 %v433
        %v563 = vunpack.c.l.b16 %v434
        %v564 = vunpack.c.h.b16 %v434
        %v565 = vunpack.c.l.b16 %v435
        %v566 = vunpack.c.h.b16 %v435
        %v567 = vunpack.c.l.b16 %v436
        %v568 = vunpack.c.h.b16 %v436
        %v569 = vunpack.c.l.b16 %v437
        %v570 = vunpack.c.h.b16 %v437
        %v571 = vunpack.c.l.b16 %v438
        %v572 = vunpack.c.h.b16 %v438
        %v573 = vunpack.c.l.b16 %v439
        %v574 = vunpack.c.h.b16 %v439
        %v575 = vunpack.c.l.b16 %v440
        %v576 = vunpack.c.h.b16 %v440
        %v577 = vunpack.c.l.b16 %v441
        %v578 = vunpack.c.h.b16 %v441
        %v579 = vunpack.c.l.b16 %v442
        %v580 = vunpack.c.h.b16 %v442
        %v581 = vunpack.c.l.b16 %v443
        %v582 = vunpack.c.h.b16 %v443
        %v583 = vunpack.c.l.b16 %v444
        %v584 = vunpack.c.h.b16 %v444
        %v585 = vpack.c.b16 %v523, %v521
        %v586 = vpack.c.b16 %v524, %v522
        %v587 = vpack.c.b16 %v527, %v525
        %v588 = vpack.c.b16 %v528, %v526
        %v589 = vpack.c.b16 %v531, %v529
        %v590 = vpack.c.b16 %v532, %v530
        %v591 = vpack.c.b16 %v535, %v533
        %v592 = vpack.c.b16 %v536, %v534
        %v593 = vpack.c.b16 %v539, %v537
        %v594 = vpack.c.b16 %v540, %v538
        %v595 = vpack.c.b16 %v543, %v541
        %v596 = vpack.c.b16 %v544, %v542
        %v597 = vpack.c.b16 %v547, %v545
        %v598 = vpack.c.b16 %v548, %v546
        %v599 = vpack.c.b16 %v551, %v549
        %v600 = vpack.c.b16 %v552, %v550
        %v601 = vpack.c.b16 %v555, %v553
        %v602 = vpack.c.b16 %v556, %v554
        %v603 = vpack.c.b16 %v559, %v557
        %v604 = vpack.c.b16 %v560, %v558
        %v605 = vpack.c.b16 %v563, %v561
        %v606 = vpack.c.b16 %v564, %v562
        %v607 = vpack.c.b16 %v567, %v565
        %v608 = vpack.c.b16 %v568, %v566
        %v609 = vpack.c.b16 %v571, %v569
        %v610 = vpack.c.b16 %v572, %v570
        %v611 = vpack.c.b16 %v575, %v573
        %v612 = vpack.c.b16 %v576, %v574
        %v613 = vpack.c.b16 %v579, %v577
        %v614 = vpack.c.b16 %v580, %v578
        %v615 = vpack.c.b16 %v583, %v581
        %v616 = vpack.c.b16 %v584, %v582
        %v681 = vunpack.c.l.b16 %v445
        %v682 = vunpack.c.h.b16 %v445
        %v683 = vunpack.c.l.b16 %v446
        %v684 = vunpack.c.h.b16 %v446
        %v685 = vunpack.c.l.b16 %v447
        %v686 = vunpack.c.h.b16 %v447
        %v687 = vunpack.c.l.b16 %v448
        %v688 = vunpack.c.h.b16 %v448
        %v689 = vunpack.c.l.b16 %v449
        %v690 = vunpack.c.h.b16 %v449
        %v691 = vunpack.c.l.b16 %v450
        %v692 = vunpack.c.h.b16 %v450
        %v693 = vunpack.c.l.b16 %v451
        %v694 = vunpack.c.h.b16 %v451
        %v695 = vunpack.c.l.b16 %v452
        %v696 = vunpack.c.h.b16 %v452
        %v697 = vunpack.c.l.b16 %v453
        %v698 = vunpack.c.h.b16 %v453
        %v699 = vunpack.c.l.b16 %v454
        %v700 = vunpack.c.h.b16 %v454
        %v701 = vunpack.c.l.b16 %v455
        %v702 = vunpack.c.h.b16 %v455
        %v703 = vunpack.c.l.b16 %v456
        %v704 = vunpack.c.h.b16 %v456
        %v705 = vunpack.c.l.b16 %v457
        %v706 = vunpack.c.h.b16 %v457
        %v707 = vunpack.c.l.b16 %v458
        %v708 = vunpack.c.h.b16 %v458
        %v709 = vunpack.c.l.b16 %v459
        %v710 = vunpack.c.h.b16 %v459
        %v711 = vunpack.c.l.b16 %v460
        %v712 = vunpack.c.h.b16 %v460
        %v713 = vunpack.c.l.b16 %v461
        %v714 = vunpack.c.h.b16 %v461
        %v715 = vunpack.c.l.b16 %v462
        %v716 = vunpack.c.h.b16 %v462
        %v717 = vunpack.c.l.b16 %v463
        %v718 = vunpack.c.h.b16 %v463
        %v719 = vunpack.c.l.b16 %v464
        %v720 = vunpack.c.h.b16 %v464
        %v721 = vunpack.c.l.b16 %v465
        %v722 = vunpack.c.h.b16 %v465
        %v723 = vunpack.c.l.b16 %v466
        %v724 = vunpack.c.h.b16 %v466
        %v725 = vunpack.c.l.b16 %v467
        %v726 = vunpack.c.h.b16 %v467
        %v727 = vunpack.c.l.b16 %v468
        %v728 = vunpack.c.h.b16 %v468
        %v729 = vunpack.c.l.b16 %v469
        %v730 = vunpack.c.h.b16 %v469
        %v731 = vunpack.c.l.b16 %v470
        %v732 = vunpack.c.h.b16 %v470
        %v733 = vunpack.c.l.b16 %v471
        %v734 = vunpack.c.h.b16 %v471
        %v735 = vunpack.c.l.b16 %v472
        %v736 = vunpack.c.h.b16 %v472
        %v737 = vunpack.c.l.b16 %v473
        %v738 = vunpack.c.h.b16 %v473
        %v739 = vunpack.c.l.b16 %v474
        %v740 = vunpack.c.h.b16 %v474
        %v741 = vunpack.c.l.b16 %v475
        %v742 = vunpack.c.h.b16 %v475
        %v743 = vunpack.c.l.b16 %v476
        %v744 = vunpack.c.h.b16 %v476
        %v745 = vpack.c.b16 %v683, %v681
        %v746 = vpack.c.b16 %v684, %v682
        %v747 = vpack.c.b16 %v687, %v685
        %v748 = vpack.c.b16 %v688, %v686
        %v749 = vpack.c.b16 %v691, %v689
        %v750 = vpack.c.b16 %v692, %v690
        %v751 = vpack.c.b16 %v695, %v693
        %v752 = vpack.c.b16 %v696, %v694
        %v753 = vpack.c.b16 %v699, %v697
        %v754 = vpack.c.b16 %v700, %v698
        %v755 = vpack.c.b16 %v703, %v701
        %v756 = vpack.c.b16 %v704, %v702
        %v757 = vpack.c.b16 %v707, %v705
        %v758 = vpack.c.b16 %v708, %v706
        %v759 = vpack.c.b16 %v711, %v709
        %v760 = vpack.c.b16 %v712, %v710
        %v761 = vpack.c.b16 %v715, %v713
        %v762 = vpack.c.b16 %v716, %v714
        %v763 = vpack.c.b16 %v719, %v717
        %v764 = vpack.c.b16 %v720, %v718
        %v765 = vpack.c.b16 %v723, %v721
        %v766 = vpack.c.b16 %v724, %v722
        %v767 = vpack.c.b16 %v727, %v725
        %v768 = vpack.c.b16 %v728, %v726
        %v769 = vpack.c.b16 %v731, %v729
        %v770 = vpack.c.b16 %v732, %v730
        %v771 = vpack.c.b16 %v735, %v733
        %v772 = vpack.c.b16 %v736, %v734
        %v773 = vpack.c.b16 %v739, %v737
        %v774 = vpack.c.b16 %v740, %v738
        %v775 = vpack.c.b16 %v743, %v741
        %v776 = vpack.c.b16 %v744, %v742
        %809 = vmatprep.subr.bf16.mxu0 %v760
        %810 = vmatpush1.bf16.msra.mxu0 %v759
        %811 = vmatprep.subr.bf16.mxu0 %v758
        %812 = vmatpush1.bf16.msra.mxu0 %v757
        %813 = vmatprep.subr.bf16.mxu0 %v756
        %814 = vmatpush1.bf16.msra.mxu0 %v755
        %815 = vmatprep.subr.bf16.mxu0 %v754
        %816 = vmatpush1.bf16.msra.mxu0 %v753
        %817 = vmatprep.subr.bf16.mxu0 %v752
        %818 = vmatpush1.bf16.msra.mxu0 %v751
        %819 = vmatprep.subr.bf16.mxu0 %v750
        %820 = vmatpush1.bf16.msra.mxu0 %v749
        %821 = vmatprep.subr.bf16.mxu0 %v748
        %822 = vmatpush1.bf16.msra.mxu0 %v747
        %823 = vmatprep.subr.bf16.mxu0 %v746
        %824 = vmatpush1.bf16.msra.mxu0 %v745
        %825 = vmatprep.subr.bf16.mxu0 %v776
        %826 = vmatpush2.bf16.msra.mxu0 %v775
        %827 = vmatprep.subr.bf16.mxu0 %v774
        %828 = vmatpush2.bf16.msra.mxu0 %v773
        %829 = vmatprep.subr.bf16.mxu0 %v772
        %830 = vmatpush2.bf16.msra.mxu0 %v771
        %831 = vmatprep.subr.bf16.mxu0 %v770
        %832 = vmatpush2.bf16.msra.mxu0 %v769
        %833 = vmatprep.subr.bf16.mxu0 %v768
        %834 = vmatpush2.bf16.msra.mxu0 %v767
        %835 = vmatprep.subr.bf16.mxu0 %v766
        %836 = vmatpush2.bf16.msra.mxu0 %v765
        %837 = vmatprep.subr.bf16.mxu0 %v764
        %838 = vmatpush2.bf16.msra.mxu0 %v763
        %839 = vmatprep.subr.bf16.mxu0 %v762
        %840 = vmatpush2.bf16.msra.mxu0 %v761
        %841 = vmatprep.mubr.bf16.mxu0 %v586
        %842 = vmatmul.mubr.bf16.gmra.mxu0 %v585
        %v843 = vpop.f32.mrf.mxu0
        %v844 = vadd.f32 %v482, %v843
        %v845 = vpop.f32.mrf.mxu0
        %v846 = vadd.f32 %v486, %v845
        %v847 = vpop.f32.mrf.mxu0
        %v848 = vadd.f32 %v482, %v847
        %v849 = vpop.f32.mrf.mxu0
        %v850 = vadd.f32 %v486, %v849
        %851 = vmatprep.mubr.bf16.mxu0 %v588
        %852 = vmatmul.mubr.bf16.gmra.mxu0 %v587
        %v853 = vpop.f32.mrf.mxu0
        %v854 = vadd.f32 %v482, %v853
        %v855 = vpop.f32.mrf.mxu0
        %v856 = vadd.f32 %v486, %v855
        %v857 = vpop.f32.mrf.mxu0
        %v858 = vadd.f32 %v482, %v857
        %v859 = vpop.f32.mrf.mxu0
        %v860 = vadd.f32 %v486, %v859
        %861 = vmatprep.mubr.bf16.mxu0 %v590
        %862 = vmatmul.mubr.bf16.gmra.mxu0 %v589
        %v863 = vpop.f32.mrf.mxu0
        %v864 = vadd.f32 %v482, %v863
        %v865 = vpop.f32.mrf.mxu0
        %v866 = vadd.f32 %v486, %v865
        %v867 = vpop.f32.mrf.mxu0
        %v868 = vadd.f32 %v482, %v867
        %v869 = vpop.f32.mrf.mxu0
        %v870 = vadd.f32 %v486, %v869
        %871 = vmatprep.mubr.bf16.mxu0 %v592
        %872 = vmatmul.mubr.bf16.gmra.mxu0 %v591
        %v873 = vpop.f32.mrf.mxu0
        %v874 = vadd.f32 %v482, %v873
        %v875 = vpop.f32.mrf.mxu0
        %v876 = vadd.f32 %v486, %v875
        %v877 = vpop.f32.mrf.mxu0
        %v878 = vadd.f32 %v482, %v877
        %v879 = vpop.f32.mrf.mxu0
        %v880 = vadd.f32 %v486, %v879
        %881 = vmatprep.mubr.bf16.mxu0 %v594
        %882 = vmatmul.mubr.bf16.gmra.mxu0 %v593
        %v883 = vpop.f32.mrf.mxu0
        %v884 = vadd.f32 %v482, %v883
        %v885 = vpop.f32.mrf.mxu0
        %v886 = vadd.f32 %v486, %v885
        %v887 = vpop.f32.mrf.mxu0
        %v888 = vadd.f32 %v482, %v887
        %v889 = vpop.f32.mrf.mxu0
        %v890 = vadd.f32 %v486, %v889
        %891 = vmatprep.mubr.bf16.mxu0 %v596
        %892 = vmatmul.mubr.bf16.gmra.mxu0 %v595
        %v893 = vpop.f32.mrf.mxu0
        %v894 = vadd.f32 %v482, %v893
        %v895 = vpop.f32.mrf.mxu0
        %v896 = vadd.f32 %v486, %v895
        %v897 = vpop.f32.mrf.mxu0
        %v898 = vadd.f32 %v482, %v897
        %v899 = vpop.f32.mrf.mxu0
        %v900 = vadd.f32 %v486, %v899
        %901 = vmatprep.mubr.bf16.mxu0 %v598
        %902 = vmatmul.mubr.bf16.gmra.mxu0 %v597
        %v903 = vpop.f32.mrf.mxu0
        %v904 = vadd.f32 %v482, %v903
        %v905 = vpop.f32.mrf.mxu0
        %v906 = vadd.f32 %v486, %v905
        %v907 = vpop.f32.mrf.mxu0
        %v908 = vadd.f32 %v482, %v907
        %v909 = vpop.f32.mrf.mxu0
        %v910 = vadd.f32 %v486, %v909
        %911 = vmatprep.mubr.bf16.mxu0 %v600
        %912 = vmatmul.mubr.bf16.gmra.mxu0 %v599
        %v913 = vpop.f32.mrf.mxu0
        %v914 = vadd.f32 %v482, %v913
        %v915 = vpop.f32.mrf.mxu0
        %v916 = vadd.f32 %v486, %v915
        %v917 = vpop.f32.mrf.mxu0
        %v918 = vadd.f32 %v482, %v917
        %v919 = vpop.f32.mrf.mxu0
        %v920 = vadd.f32 %v486, %v919
        %921 = vmatprep.mubr.bf16.mxu0 %v602
        %922 = vmatmul.mubr.bf16.gmra.mxu0 %v601
        %v923 = vpop.f32.mrf.mxu0
        %v924 = vadd.f32 %v482, %v923
        %v925 = vpop.f32.mrf.mxu0
        %v926 = vadd.f32 %v486, %v925
        %v927 = vpop.f32.mrf.mxu0
        %v928 = vadd.f32 %v482, %v927
        %v929 = vpop.f32.mrf.mxu0
        %v930 = vadd.f32 %v486, %v929
        %931 = vmatprep.mubr.bf16.mxu0 %v604
        %932 = vmatmul.mubr.bf16.gmra.mxu0 %v603
        %v933 = vpop.f32.mrf.mxu0
        %v934 = vadd.f32 %v482, %v933
        %v935 = vpop.f32.mrf.mxu0
        %v936 = vadd.f32 %v486, %v935
        %v937 = vpop.f32.mrf.mxu0
        %v938 = vadd.f32 %v482, %v937
        %v939 = vpop.f32.mrf.mxu0
        %v940 = vadd.f32 %v486, %v939
        %941 = vmatprep.mubr.bf16.mxu0 %v606
        %942 = vmatmul.mubr.bf16.gmra.mxu0 %v605
        %v943 = vpop.f32.mrf.mxu0
        %v944 = vadd.f32 %v482, %v943
        %v945 = vpop.f32.mrf.mxu0
        %v946 = vadd.f32 %v486, %v945
        %v947 = vpop.f32.mrf.mxu0
        %v948 = vadd.f32 %v482, %v947
        %v949 = vpop.f32.mrf.mxu0
        %v950 = vadd.f32 %v486, %v949
        %951 = vmatprep.mubr.bf16.mxu0 %v608
        %952 = vmatmul.mubr.bf16.gmra.mxu0 %v607
        %v953 = vpop.f32.mrf.mxu0
        %v954 = vadd.f32 %v482, %v953
        %v955 = vpop.f32.mrf.mxu0
        %v956 = vadd.f32 %v486, %v955
        %v957 = vpop.f32.mrf.mxu0
        %v958 = vadd.f32 %v482, %v957
        %v959 = vpop.f32.mrf.mxu0
        %v960 = vadd.f32 %v486, %v959
        %961 = vmatprep.mubr.bf16.mxu0 %v610
        %962 = vmatmul.mubr.bf16.gmra.mxu0 %v609
        %v963 = vpop.f32.mrf.mxu0
        %v964 = vadd.f32 %v482, %v963
        %v965 = vpop.f32.mrf.mxu0
        %v966 = vadd.f32 %v486, %v965
        %v967 = vpop.f32.mrf.mxu0
        %v968 = vadd.f32 %v482, %v967
        %v969 = vpop.f32.mrf.mxu0
        %v970 = vadd.f32 %v486, %v969
        %971 = vmatprep.mubr.bf16.mxu0 %v612
        %972 = vmatmul.mubr.bf16.gmra.mxu0 %v611
        %v973 = vpop.f32.mrf.mxu0
        %v974 = vadd.f32 %v482, %v973
        %v975 = vpop.f32.mrf.mxu0
        %v976 = vadd.f32 %v486, %v975
        %v977 = vpop.f32.mrf.mxu0
        %v978 = vadd.f32 %v482, %v977
        %v979 = vpop.f32.mrf.mxu0
        %v980 = vadd.f32 %v486, %v979
        %981 = vmatprep.mubr.bf16.mxu0 %v614
        %982 = vmatmul.mubr.bf16.gmra.mxu0 %v613
        %v983 = vpop.f32.mrf.mxu0
        %v984 = vadd.f32 %v482, %v983
        %v985 = vpop.f32.mrf.mxu0
        %v986 = vadd.f32 %v486, %v985
        %v987 = vpop.f32.mrf.mxu0
        %v988 = vadd.f32 %v482, %v987
        %v989 = vpop.f32.mrf.mxu0
        %v990 = vadd.f32 %v486, %v989
        %991 = vmatprep.mubr.bf16.mxu0 %v616
        %992 = vmatmul.mubr.bf16.gmra.mxu0 %v615
        %v993 = vpop.f32.mrf.mxu0
        %v994 = vadd.f32 %v482, %v993
        %v995 = vpop.f32.mrf.mxu0
        %v996 = vadd.f32 %v486, %v995
        %v997 = vpop.f32.mrf.mxu0
        %v998 = vadd.f32 %v482, %v997
        %v999 = vpop.f32.mrf.mxu0
        %v1000 = vadd.f32 %v486, %v999
        %1001 = vdwg.mxu0
        %v1002 = vmax.f32 %v844, 0.0
        %v1003 = vmax.f32 %v846, 0.0
        %v1004 = vmax.f32 %v848, 0.0
        %v1005 = vmax.f32 %v850, 0.0
        %v1006 = vmax.f32 %v854, 0.0
        %v1007 = vmax.f32 %v856, 0.0
        %v1008 = vmax.f32 %v858, 0.0
        %v1009 = vmax.f32 %v860, 0.0
        %v1010 = vmax.f32 %v864, 0.0
        %v1011 = vmax.f32 %v866, 0.0
        %v1012 = vmax.f32 %v868, 0.0
        %v1013 = vmax.f32 %v870, 0.0
        %v1014 = vmax.f32 %v874, 0.0
        %v1015 = vmax.f32 %v876, 0.0
        %v1016 = vmax.f32 %v878, 0.0
        %v1017 = vmax.f32 %v880, 0.0
        %v1018 = vmax.f32 %v884, 0.0
        %v1019 = vmax.f32 %v886, 0.0
        %v1020 = vmax.f32 %v888, 0.0
        %v1021 = vmax.f32 %v890, 0.0
        %v1022 = vmax.f32 %v894, 0.0
        %v1023 = vmax.f32 %v896, 0.0
        %v1024 = vmax.f32 %v898, 0.0
        %v1025 = vmax.f32 %v900, 0.0
        %v1026 = vmax.f32 %v904, 0.0
        %v1027 = vmax.f32 %v906, 0.0
        %v1028 = vmax.f32 %v908, 0.0
        %v1029 = vmax.f32 %v910, 0.0
        %v1030 = vmax.f32 %v914, 0.0
        %v1031 = vmax.f32 %v916, 0.0
        %v1032 = vmax.f32 %v918, 0.0
        %v1033 = vmax.f32 %v920, 0.0
        %v1034 = vmax.f32 %v924, 0.0
        %v1035 = vmax.f32 %v926, 0.0
        %v1036 = vmax.f32 %v928, 0.0
        %v1037 = vmax.f32 %v930, 0.0
        %v1038 = vmax.f32 %v934, 0.0
        %v1039 = vmax.f32 %v936, 0.0
        %v1040 = vmax.f32 %v938, 0.0
        %v1041 = vmax.f32 %v940, 0.0
        %v1042 = vmax.f32 %v944, 0.0
        %v1043 = vmax.f32 %v946, 0.0
        %v1044 = vmax.f32 %v948, 0.0
        %v1045 = vmax.f32 %v950, 0.0
        %v1046 = vmax.f32 %v954, 0.0
        %v1047 = vmax.f32 %v956, 0.0
        %v1048 = vmax.f32 %v958, 0.0
        %v1049 = vmax.f32 %v960, 0.0
        %v1050 = vmax.f32 %v964, 0.0
        %v1051 = vmax.f32 %v966, 0.0
        %v1052 = vmax.f32 %v968, 0.0
        %v1053 = vmax.f32 %v970, 0.0
        %v1054 = vmax.f32 %v974, 0.0
        %v1055 = vmax.f32 %v976, 0.0
        %v1056 = vmax.f32 %v978, 0.0
        %v1057 = vmax.f32 %v980, 0.0
        %v1058 = vmax.f32 %v984, 0.0
        %v1059 = vmax.f32 %v986, 0.0
        %v1060 = vmax.f32 %v988, 0.0
        %v1061 = vmax.f32 %v990, 0.0
        %v1062 = vmax.f32 %v994, 0.0
        %v1063 = vmax.f32 %v996, 0.0
        %v1064 = vmax.f32 %v998, 0.0
        %v1065 = vmax.f32 %v1000, 0.0
        %v1066 = vpack.c.bf16 %v1004, %v1002
        %v1067 = vpack.c.bf16 %v1005, %v1003
        %v1068 = vpack.c.bf16 %v1008, %v1006
        %v1069 = vpack.c.bf16 %v1009, %v1007
        %v1070 = vpack.c.bf16 %v1012, %v1010
        %v1071 = vpack.c.bf16 %v1013, %v1011
        %v1072 = vpack.c.bf16 %v1016, %v1014
        %v1073 = vpack.c.bf16 %v1017, %v1015
        %v1074 = vpack.c.bf16 %v1020, %v1018
        %v1075 = vpack.c.bf16 %v1021, %v1019
        %v1076 = vpack.c.bf16 %v1024, %v1022
        %v1077 = vpack.c.bf16 %v1025, %v1023
        %v1078 = vpack.c.bf16 %v1028, %v1026
        %v1079 = vpack.c.bf16 %v1029, %v1027
        %v1080 = vpack.c.bf16 %v1032, %v1030
        %v1081 = vpack.c.bf16 %v1033, %v1031
        %v1082 = vpack.c.bf16 %v1036, %v1034
        %v1083 = vpack.c.bf16 %v1037, %v1035
        %v1084 = vpack.c.bf16 %v1040, %v1038
        %v1085 = vpack.c.bf16 %v1041, %v1039
        %v1086 = vpack.c.bf16 %v1044, %v1042
        %v1087 = vpack.c.bf16 %v1045, %v1043
        %v1088 = vpack.c.bf16 %v1048, %v1046
        %v1089 = vpack.c.bf16 %v1049, %v1047
        %v1090 = vpack.c.bf16 %v1052, %v1050
        %v1091 = vpack.c.bf16 %v1053, %v1051
        %v1092 = vpack.c.bf16 %v1056, %v1054
        %v1093 = vpack.c.bf16 %v1057, %v1055
        %v1094 = vpack.c.bf16 %v1060, %v1058
        %v1095 = vpack.c.bf16 %v1061, %v1059
        %v1096 = vpack.c.bf16 %v1064, %v1062
        %v1097 = vpack.c.bf16 %v1065, %v1063
        %v1098 = vld [vmem:[#allocation7] sm:$0xf]
        %v1099 = vld [vmem:[#allocation7 + $0x4] sm:$0xf]
        %v1100 = vld [vmem:[#allocation7 + $0x8] sm:$0xf]
        %v1101 = vld [vmem:[#allocation7 + $0xc] sm:$0xf]
        %v1102 = vld [vmem:[#allocation7 + $0x10] sm:$0xf]
        %v1103 = vld [vmem:[#allocation7 + $0x14] sm:$0xf]
        %v1104 = vld [vmem:[#allocation7 + $0x18] sm:$0xf]
        %v1105 = vld [vmem:[#allocation7 + $0x1c] sm:$0xf]
        %v1106 = vld [vmem:[#allocation7 + $0x20] sm:$0xf]
        %v1107 = vld [vmem:[#allocation7 + $0x24] sm:$0xf]
        %v1108 = vld [vmem:[#allocation7 + $0x28] sm:$0xf]
        %v1109 = vld [vmem:[#allocation7 + $0x2c] sm:$0xf]
        %v1110 = vld [vmem:[#allocation7 + $0x30] sm:$0xf]
        %v1111 = vld [vmem:[#allocation7 + $0x34] sm:$0xf]
        %v1112 = vld [vmem:[#allocation7 + $0x38] sm:$0xf]
        %v1113 = vld [vmem:[#allocation7 + $0x3c] sm:$0xf]
        %v1114 = vld [vmem:[#allocation7 + $0x40] sm:$0xf]
        %v1115 = vld [vmem:[#allocation7 + $0x44] sm:$0xf]
        %v1116 = vld [vmem:[#allocation7 + $0x48] sm:$0xf]
        %v1117 = vld [vmem:[#allocation7 + $0x4c] sm:$0xf]
        %v1118 = vld [vmem:[#allocation7 + $0x50] sm:$0xf]
        %v1119 = vld [vmem:[#allocation7 + $0x54] sm:$0xf]
        %v1120 = vld [vmem:[#allocation7 + $0x58] sm:$0xf]
        %v1121 = vld [vmem:[#allocation7 + $0x5c] sm:$0xf]
        %v1122 = vld [vmem:[#allocation7 + $0x60] sm:$0xf]
        %v1123 = vld [vmem:[#allocation7 + $0x64] sm:$0xf]
        %v1124 = vld [vmem:[#allocation7 + $0x68] sm:$0xf]
        %v1125 = vld [vmem:[#allocation7 + $0x6c] sm:$0xf]
        %v1126 = vld [vmem:[#allocation7 + $0x70] sm:$0xf]
        %v1127 = vld [vmem:[#allocation7 + $0x74] sm:$0xf]
        %v1128 = vld [vmem:[#allocation7 + $0x78] sm:$0xf]
        %v1129 = vld [vmem:[#allocation7 + $0x7c] sm:$0xf]
        %v1130 = vld [vmem:[%s4] sm:$0x1]
        %v1132 = vlaneseq
        %v1133 = vshrl.u32 %v1132, 7
        %v1134 = vsub.s32 0, %v1133
        %v1135 = vrot.slane %v1130, %v1134
        %v1169 = vunpack.c.l.b16 %v1098
        %v1170 = vunpack.c.l.b16 %v1099
        %v1171 = vunpack.c.l.b16 %v1100
        %v1172 = vunpack.c.l.b16 %v1101
        %v1173 = vunpack.c.l.b16 %v1102
        %v1174 = vunpack.c.l.b16 %v1103
        %v1175 = vunpack.c.l.b16 %v1104
        %v1176 = vunpack.c.l.b16 %v1105
        %v1177 = vunpack.c.l.b16 %v1106
        %v1178 = vunpack.c.l.b16 %v1107
        %v1179 = vunpack.c.l.b16 %v1108
        %v1180 = vunpack.c.l.b16 %v1109
        %v1181 = vunpack.c.l.b16 %v1110
        %v1182 = vunpack.c.l.b16 %v1111
        %v1183 = vunpack.c.l.b16 %v1112
        %v1184 = vunpack.c.l.b16 %v1113
        %v1185 = vunpack.c.l.b16 %v1114
        %v1186 = vunpack.c.l.b16 %v1115
        %v1187 = vunpack.c.l.b16 %v1116
        %v1188 = vunpack.c.l.b16 %v1117
        %v1189 = vunpack.c.l.b16 %v1118
        %v1190 = vunpack.c.l.b16 %v1119
        %v1191 = vunpack.c.l.b16 %v1120
        %v1192 = vunpack.c.l.b16 %v1121
        %v1193 = vunpack.c.l.b16 %v1122
        %v1194 = vunpack.c.l.b16 %v1123
        %v1195 = vunpack.c.l.b16 %v1124
        %v1196 = vunpack.c.l.b16 %v1125
        %v1197 = vunpack.c.l.b16 %v1126
        %v1198 = vunpack.c.l.b16 %v1127
        %v1199 = vunpack.c.l.b16 %v1128
        %v1200 = vunpack.c.l.b16 %v1129
        %v1201 = vpack.c.b16 %v1170, %v1169
        %v1202 = vpack.c.b16 %v1172, %v1171
        %v1203 = vpack.c.b16 %v1174, %v1173
        %v1204 = vpack.c.b16 %v1176, %v1175
        %v1205 = vpack.c.b16 %v1178, %v1177
        %v1206 = vpack.c.b16 %v1180, %v1179
        %v1207 = vpack.c.b16 %v1182, %v1181
        %v1208 = vpack.c.b16 %v1184, %v1183
        %v1209 = vpack.c.b16 %v1186, %v1185
        %v1210 = vpack.c.b16 %v1188, %v1187
        %v1211 = vpack.c.b16 %v1190, %v1189
        %v1212 = vpack.c.b16 %v1192, %v1191
        %v1213 = vpack.c.b16 %v1194, %v1193
        %v1214 = vpack.c.b16 %v1196, %v1195
        %v1215 = vpack.c.b16 %v1198, %v1197
        %v1216 = vpack.c.b16 %v1200, %v1199
        %1233 = vmatprep.subr.bf16.mxu0 0
        %1234 = vmatpush1.bf16.msra.mxu0 %v1208
        %1235 = vmatprep.subr.bf16.mxu0 0
        %1236 = vmatpush1.bf16.msra.mxu0 %v1207
        %1237 = vmatprep.subr.bf16.mxu0 0
        %1238 = vmatpush1.bf16.msra.mxu0 %v1206
        %1239 = vmatprep.subr.bf16.mxu0 0
        %1240 = vmatpush1.bf16.msra.mxu0 %v1205
        %1241 = vmatprep.subr.bf16.mxu0 0
        %1242 = vmatpush1.bf16.msra.mxu0 %v1204
        %1243 = vmatprep.subr.bf16.mxu0 0
        %1244 = vmatpush1.bf16.msra.mxu0 %v1203
        %1245 = vmatprep.subr.bf16.mxu0 0
        %1246 = vmatpush1.bf16.msra.mxu0 %v1202
        %1247 = vmatprep.subr.bf16.mxu0 0
        %1248 = vmatpush1.bf16.msra.mxu0 %v1201
        %1249 = vmatprep.subr.bf16.mxu0 0
        %1250 = vmatpush2.bf16.msra.mxu0 %v1216
        %1251 = vmatprep.subr.bf16.mxu0 0
        %1252 = vmatpush2.bf16.msra.mxu0 %v1215
        %1253 = vmatprep.subr.bf16.mxu0 0
        %1254 = vmatpush2.bf16.msra.mxu0 %v1214
        %1255 = vmatprep.subr.bf16.mxu0 0
        %1256 = vmatpush2.bf16.msra.mxu0 %v1213
        %1257 = vmatprep.subr.bf16.mxu0 0
        %1258 = vmatpush2.bf16.msra.mxu0 %v1212
        %1259 = vmatprep.subr.bf16.mxu0 0
        %1260 = vmatpush2.bf16.msra.mxu0 %v1211
        %1261 = vmatprep.subr.bf16.mxu0 0
        %1262 = vmatpush2.bf16.msra.mxu0 %v1210
        %1263 = vmatprep.subr.bf16.mxu0 0
        %1264 = vmatpush2.bf16.msra.mxu0 %v1209
        %1265 = vmatprep.mubr.bf16.mxu0 %v1067
        %1266 = vmatmul.mubr.bf16.gmra.mxu0 %v1066
        %v1267 = vpop.f32.mrf.mxu0
        %v1268 = vadd.f32 %v1135, %v1267
        %v1269 = vpop.f32.mrf.mxu0
        %v1270 = vpop.f32.mrf.mxu0
        %v1271 = vadd.f32 %v1135, %v1270
        %v1272 = vpop.f32.mrf.mxu0
        %1273 = vmatprep.mubr.bf16.mxu0 %v1069
        %1274 = vmatmul.mubr.bf16.gmra.mxu0 %v1068
        %v1275 = vpop.f32.mrf.mxu0
        %v1276 = vadd.f32 %v1135, %v1275
        %v1277 = vpop.f32.mrf.mxu0
        %v1278 = vpop.f32.mrf.mxu0
        %v1279 = vadd.f32 %v1135, %v1278
        %v1280 = vpop.f32.mrf.mxu0
        %1281 = vmatprep.mubr.bf16.mxu0 %v1071
        %1282 = vmatmul.mubr.bf16.gmra.mxu0 %v1070
        %v1283 = vpop.f32.mrf.mxu0
        %v1284 = vadd.f32 %v1135, %v1283
        %v1285 = vpop.f32.mrf.mxu0
        %v1286 = vpop.f32.mrf.mxu0
        %v1287 = vadd.f32 %v1135, %v1286
        %v1288 = vpop.f32.mrf.mxu0
        %1289 = vmatprep.mubr.bf16.mxu0 %v1073
        %1290 = vmatmul.mubr.bf16.gmra.mxu0 %v1072
        %v1291 = vpop.f32.mrf.mxu0
        %v1292 = vadd.f32 %v1135, %v1291
        %v1293 = vpop.f32.mrf.mxu0
        %v1294 = vpop.f32.mrf.mxu0
        %v1295 = vadd.f32 %v1135, %v1294
        %v1296 = vpop.f32.mrf.mxu0
        %1297 = vmatprep.mubr.bf16.mxu0 %v1075
        %1298 = vmatmul.mubr.bf16.gmra.mxu0 %v1074
        %v1299 = vpop.f32.mrf.mxu0
        %v1300 = vadd.f32 %v1135, %v1299
        %v1301 = vpop.f32.mrf.mxu0
        %v1302 = vpop.f32.mrf.mxu0
        %v1303 = vadd.f32 %v1135, %v1302
        %v1304 = vpop.f32.mrf.mxu0
        %1305 = vmatprep.mubr.bf16.mxu0 %v1077
        %1306 = vmatmul.mubr.bf16.gmra.mxu0 %v1076
        %v1307 = vpop.f32.mrf.mxu0
        %v1308 = vadd.f32 %v1135, %v1307
        %v1309 = vpop.f32.mrf.mxu0
        %v1310 = vpop.f32.mrf.mxu0
        %v1311 = vadd.f32 %v1135, %v1310
        %v1312 = vpop.f32.mrf.mxu0
        %1313 = vmatprep.mubr.bf16.mxu0 %v1079
        %1314 = vmatmul.mubr.bf16.gmra.mxu0 %v1078
        %v1315 = vpop.f32.mrf.mxu0
        %v1316 = vadd.f32 %v1135, %v1315
        %v1317 = vpop.f32.mrf.mxu0
        %v1318 = vpop.f32.mrf.mxu0
        %v1319 = vadd.f32 %v1135, %v1318
        %v1320 = vpop.f32.mrf.mxu0
        %1321 = vmatprep.mubr.bf16.mxu0 %v1081
        %1322 = vmatmul.mubr.bf16.gmra.mxu0 %v1080
        %v1323 = vpop.f32.mrf.mxu0
        %v1324 = vadd.f32 %v1135, %v1323
        %v1325 = vpop.f32.mrf.mxu0
        %v1326 = vpop.f32.mrf.mxu0
        %v1327 = vadd.f32 %v1135, %v1326
        %v1328 = vpop.f32.mrf.mxu0
        %1329 = vmatprep.mubr.bf16.mxu0 %v1083
        %1330 = vmatmul.mubr.bf16.gmra.mxu0 %v1082
        %v1331 = vpop.f32.mrf.mxu0
        %v1332 = vadd.f32 %v1135, %v1331
        %v1333 = vpop.f32.mrf.mxu0
        %v1334 = vpop.f32.mrf.mxu0
        %v1335 = vadd.f32 %v1135, %v1334
        %v1336 = vpop.f32.mrf.mxu0
        %1337 = vmatprep.mubr.bf16.mxu0 %v1085
        %1338 = vmatmul.mubr.bf16.gmra.mxu0 %v1084
        %v1339 = vpop.f32.mrf.mxu0
        %v1340 = vadd.f32 %v1135, %v1339
        %v1341 = vpop.f32.mrf.mxu0
        %v1342 = vpop.f32.mrf.mxu0
        %v1343 = vadd.f32 %v1135, %v1342
        %v1344 = vpop.f32.mrf.mxu0
        %1345 = vmatprep.mubr.bf16.mxu0 %v1087
        %1346 = vmatmul.mubr.bf16.gmra.mxu0 %v1086
        %v1347 = vpop.f32.mrf.mxu0
        %v1348 = vadd.f32 %v1135, %v1347
        %v1349 = vpop.f32.mrf.mxu0
        %v1350 = vpop.f32.mrf.mxu0
        %v1351 = vadd.f32 %v1135, %v1350
        %v1352 = vpop.f32.mrf.mxu0
        %1353 = vmatprep.mubr.bf16.mxu0 %v1089
        %1354 = vmatmul.mubr.bf16.gmra.mxu0 %v1088
        %v1355 = vpop.f32.mrf.mxu0
        %v1356 = vadd.f32 %v1135, %v1355
        %v1357 = vpop.f32.mrf.mxu0
        %v1358 = vpop.f32.mrf.mxu0
        %v1359 = vadd.f32 %v1135, %v1358
        %v1360 = vpop.f32.mrf.mxu0
        %1361 = vmatprep.mubr.bf16.mxu0 %v1091
        %1362 = vmatmul.mubr.bf16.gmra.mxu0 %v1090
        %v1363 = vpop.f32.mrf.mxu0
        %v1364 = vadd.f32 %v1135, %v1363
        %v1365 = vpop.f32.mrf.mxu0
        %v1366 = vpop.f32.mrf.mxu0
        %v1367 = vadd.f32 %v1135, %v1366
        %v1368 = vpop.f32.mrf.mxu0
        %1369 = vmatprep.mubr.bf16.mxu0 %v1093
        %1370 = vmatmul.mubr.bf16.gmra.mxu0 %v1092
        %v1371 = vpop.f32.mrf.mxu0
        %v1372 = vadd.f32 %v1135, %v1371
        %v1373 = vpop.f32.mrf.mxu0
        %v1374 = vpop.f32.mrf.mxu0
        %v1375 = vadd.f32 %v1135, %v1374
        %v1376 = vpop.f32.mrf.mxu0
        %1377 = vmatprep.mubr.bf16.mxu0 %v1095
        %1378 = vmatmul.mubr.bf16.gmra.mxu0 %v1094
        %v1379 = vpop.f32.mrf.mxu0
        %v1380 = vadd.f32 %v1135, %v1379
        %v1381 = vpop.f32.mrf.mxu0
        %v1382 = vpop.f32.mrf.mxu0
        %v1383 = vadd.f32 %v1135, %v1382
        %v1384 = vpop.f32.mrf.mxu0
        %1385 = vmatprep.mubr.bf16.mxu0 %v1097
        %1386 = vmatmul.mubr.bf16.gmra.mxu0 %v1096
        %v1387 = vpop.f32.mrf.mxu0
        %v1388 = vadd.f32 %v1135, %v1387
        %v1389 = vpop.f32.mrf.mxu0
        %v1390 = vpop.f32.mrf.mxu0
        %v1391 = vadd.f32 %v1135, %v1390
        %v1392 = vpop.f32.mrf.mxu0
        %1393 = vdwg.mxu0
        %v1394 = vmax.f32 %v1268, 0.0
        %v1395 = vmax.f32 %v1271, 0.0
        %v1396 = vmax.f32 %v1276, 0.0
        %v1397 = vmax.f32 %v1279, 0.0
        %v1398 = vmax.f32 %v1284, 0.0
        %v1399 = vmax.f32 %v1287, 0.0
        %v1400 = vmax.f32 %v1292, 0.0
        %v1401 = vmax.f32 %v1295, 0.0
        %v1402 = vmax.f32 %v1300, 0.0
        %v1403 = vmax.f32 %v1303, 0.0
        %v1404 = vmax.f32 %v1308, 0.0
        %v1405 = vmax.f32 %v1311, 0.0
        %v1406 = vmax.f32 %v1316, 0.0
        %v1407 = vmax.f32 %v1319, 0.0
        %v1408 = vmax.f32 %v1324, 0.0
        %v1409 = vmax.f32 %v1327, 0.0
        %v1410 = vmax.f32 %v1332, 0.0
        %v1411 = vmax.f32 %v1335, 0.0
        %v1412 = vmax.f32 %v1340, 0.0
        %v1413 = vmax.f32 %v1343, 0.0
        %v1414 = vmax.f32 %v1348, 0.0
        %v1415 = vmax.f32 %v1351, 0.0
        %v1416 = vmax.f32 %v1356, 0.0
        %v1417 = vmax.f32 %v1359, 0.0
        %v1418 = vmax.f32 %v1364, 0.0
        %v1419 = vmax.f32 %v1367, 0.0
        %v1420 = vmax.f32 %v1372, 0.0
        %v1421 = vmax.f32 %v1375, 0.0
        %v1422 = vmax.f32 %v1380, 0.0
        %v1423 = vmax.f32 %v1383, 0.0
        %v1424 = vmax.f32 %v1388, 0.0
        %v1425 = vmax.f32 %v1391, 0.0
        %v1426 = vpack.c.bf16 %v1395, %v1394
        %v1427 = vpack.c.bf16 %v1397, %v1396
        %v1428 = vpack.c.bf16 %v1399, %v1398
        %v1429 = vpack.c.bf16 %v1401, %v1400
        %v1430 = vpack.c.bf16 %v1403, %v1402
        %v1431 = vpack.c.bf16 %v1405, %v1404
        %v1432 = vpack.c.bf16 %v1407, %v1406
        %v1433 = vpack.c.bf16 %v1409, %v1408
        %v1434 = vpack.c.bf16 %v1411, %v1410
        %v1435 = vpack.c.bf16 %v1413, %v1412
        %v1436 = vpack.c.bf16 %v1415, %v1414
        %v1437 = vpack.c.bf16 %v1417, %v1416
        %v1438 = vpack.c.bf16 %v1419, %v1418
        %v1439 = vpack.c.bf16 %v1421, %v1420
        %v1440 = vpack.c.bf16 %v1423, %v1422
        %v1441 = vpack.c.bf16 %v1425, %v1424
        %v1442 = vld [vmem:[#allocation8] sm:$0xf]
        %v1443 = vld [vmem:[#allocation8 + $0x4] sm:$0xf]
        %v1444 = vld [vmem:[#allocation8 + $0x8] sm:$0xf]
        %v1445 = vld [vmem:[#allocation8 + $0xc] sm:$0xf]
        %v1446 = vld [vmem:[#allocation8 + $0x10] sm:$0xf]
        %v1447 = vld [vmem:[#allocation8 + $0x14] sm:$0xf]
        %v1448 = vld [vmem:[#allocation8 + $0x18] sm:$0xf]
        %v1449 = vld [vmem:[#allocation8 + $0x1c] sm:$0xf]
        %v1450 = vld [vmem:[#allocation8 + $0x20] sm:$0xf]
        %v1451 = vld [vmem:[#allocation8 + $0x24] sm:$0xf]
        %v1452 = vld [vmem:[#allocation8 + $0x28] sm:$0xf]
        %v1453 = vld [vmem:[#allocation8 + $0x2c] sm:$0xf]
        %v1454 = vld [vmem:[#allocation8 + $0x30] sm:$0xf]
        %v1455 = vld [vmem:[#allocation8 + $0x34] sm:$0xf]
        %v1456 = vld [vmem:[#allocation8 + $0x38] sm:$0xf]
        %v1457 = vld [vmem:[#allocation8 + $0x3c] sm:$0xf]
        %v1458 = vld [vmem:[%s6] sm:$0x1]
        %v1460 = vlaneseq
        %v1461 = vshrl.u32 %v1460, 7
        %v1462 = vsub.s32 0, %v1461
        %v1463 = vrot.slane %v1458, %v1462
        %v1481 = vunpack.c.l.b16 %v1442
        %v1482 = vunpack.c.l.b16 %v1443
        %v1483 = vunpack.c.l.b16 %v1444
        %v1484 = vunpack.c.l.b16 %v1445
        %v1485 = vunpack.c.l.b16 %v1446
        %v1486 = vunpack.c.l.b16 %v1447
        %v1487 = vunpack.c.l.b16 %v1448
        %v1488 = vunpack.c.l.b16 %v1449
        %v1489 = vunpack.c.l.b16 %v1450
        %v1490 = vunpack.c.l.b16 %v1451
        %v1491 = vunpack.c.l.b16 %v1452
        %v1492 = vunpack.c.l.b16 %v1453
        %v1493 = vunpack.c.l.b16 %v1454
        %v1494 = vunpack.c.l.b16 %v1455
        %v1495 = vunpack.c.l.b16 %v1456
        %v1496 = vunpack.c.l.b16 %v1457
        %v1497 = vpack.c.b16 %v1482, %v1481
        %v1498 = vpack.c.b16 %v1484, %v1483
        %v1499 = vpack.c.b16 %v1486, %v1485
        %v1500 = vpack.c.b16 %v1488, %v1487
        %v1501 = vpack.c.b16 %v1490, %v1489
        %v1502 = vpack.c.b16 %v1492, %v1491
        %v1503 = vpack.c.b16 %v1494, %v1493
        %v1504 = vpack.c.b16 %v1496, %v1495
        %1513 = vmatprep.subr.bf16.mxu0 0
        %1514 = vmatpush1.bf16.msra.mxu0 %v1504
        %1515 = vmatprep.subr.bf16.mxu0 0
        %1516 = vmatpush1.bf16.msra.mxu0 %v1503
        %1517 = vmatprep.subr.bf16.mxu0 0
        %1518 = vmatpush1.bf16.msra.mxu0 %v1502
        %1519 = vmatprep.subr.bf16.mxu0 0
        %1520 = vmatpush1.bf16.msra.mxu0 %v1501
        %1521 = vmatprep.subr.bf16.mxu0 0
        %1522 = vmatpush1.bf16.msra.mxu0 %v1500
        %1523 = vmatprep.subr.bf16.mxu0 0
        %1524 = vmatpush1.bf16.msra.mxu0 %v1499
        %1525 = vmatprep.subr.bf16.mxu0 0
        %1526 = vmatpush1.bf16.msra.mxu0 %v1498
        %1527 = vmatprep.subr.bf16.mxu0 0
        %1528 = vmatpush1.bf16.msra.mxu0 %v1497
        %1529 = vmatprep.subr.bf16.mxu0 0
        %1530 = vmatpush2.bf16.msra.mxu0 0
        %1531 = vmatprep.subr.bf16.mxu0 0
        %1532 = vmatpush2.bf16.msra.mxu0 0
        %1533 = vmatprep.subr.bf16.mxu0 0
        %1534 = vmatpush2.bf16.msra.mxu0 0
        %1535 = vmatprep.subr.bf16.mxu0 0
        %1536 = vmatpush2.bf16.msra.mxu0 0
        %1537 = vmatprep.subr.bf16.mxu0 0
        %1538 = vmatpush2.bf16.msra.mxu0 0
        %1539 = vmatprep.subr.bf16.mxu0 0
        %1540 = vmatpush2.bf16.msra.mxu0 0
        %1541 = vmatprep.subr.bf16.mxu0 0
        %1542 = vmatpush2.bf16.msra.mxu0 0
        %1543 = vmatprep.subr.bf16.mxu0 0
        %1544 = vmatpush2.bf16.msra.mxu0 0
        %1545 = vmatprep.mubr.bf16.mxu0 0
        %1546 = vmatmul.mubr.bf16.gmra.mxu0 %v1426
        %v1547 = vpop.f32.mrf.mxu0
        %v1548 = vadd.f32 %v1463, %v1547
        %v1549 = vpop.f32.mrf.mxu0
        %v1550 = vpop.f32.mrf.mxu0
        %v1551 = vadd.f32 %v1463, %v1550
        %v1552 = vpop.f32.mrf.mxu0
        %1553 = vmatprep.mubr.bf16.mxu0 0
        %1554 = vmatmul.mubr.bf16.gmra.mxu0 %v1427
        %v1555 = vpop.f32.mrf.mxu0
        %v1556 = vadd.f32 %v1463, %v1555
        %v1557 = vpop.f32.mrf.mxu0
        %v1558 = vpop.f32.mrf.mxu0
        %v1559 = vadd.f32 %v1463, %v1558
        %v1560 = vpop.f32.mrf.mxu0
        %1561 = vmatprep.mubr.bf16.mxu0 0
        %1562 = vmatmul.mubr.bf16.gmra.mxu0 %v1428
        %v1563 = vpop.f32.mrf.mxu0
        %v1564 = vadd.f32 %v1463, %v1563
        %v1565 = vpop.f32.mrf.mxu0
        %v1566 = vpop.f32.mrf.mxu0
        %v1567 = vadd.f32 %v1463, %v1566
        %v1568 = vpop.f32.mrf.mxu0
        %1569 = vmatprep.mubr.bf16.mxu0 0
        %1570 = vmatmul.mubr.bf16.gmra.mxu0 %v1429
        %v1571 = vpop.f32.mrf.mxu0
        %v1572 = vadd.f32 %v1463, %v1571
        %v1573 = vpop.f32.mrf.mxu0
        %v1574 = vpop.f32.mrf.mxu0
        %v1575 = vadd.f32 %v1463, %v1574
        %v1576 = vpop.f32.mrf.mxu0
        %1577 = vmatprep.mubr.bf16.mxu0 0
        %1578 = vmatmul.mubr.bf16.gmra.mxu0 %v1430
        %v1579 = vpop.f32.mrf.mxu0
        %v1580 = vadd.f32 %v1463, %v1579
        %v1581 = vpop.f32.mrf.mxu0
        %v1582 = vpop.f32.mrf.mxu0
        %v1583 = vadd.f32 %v1463, %v1582
        %v1584 = vpop.f32.mrf.mxu0
        %1585 = vmatprep.mubr.bf16.mxu0 0
        %1586 = vmatmul.mubr.bf16.gmra.mxu0 %v1431
        %v1587 = vpop.f32.mrf.mxu0
        %v1588 = vadd.f32 %v1463, %v1587
        %v1589 = vpop.f32.mrf.mxu0
        %v1590 = vpop.f32.mrf.mxu0
        %v1591 = vadd.f32 %v1463, %v1590
        %v1592 = vpop.f32.mrf.mxu0
        %1593 = vmatprep.mubr.bf16.mxu0 0
        %1594 = vmatmul.mubr.bf16.gmra.mxu0 %v1432
        %v1595 = vpop.f32.mrf.mxu0
        %v1596 = vadd.f32 %v1463, %v1595
        %v1597 = vpop.f32.mrf.mxu0
        %v1598 = vpop.f32.mrf.mxu0
        %v1599 = vadd.f32 %v1463, %v1598
        %v1600 = vpop.f32.mrf.mxu0
        %1601 = vmatprep.mubr.bf16.mxu0 0
        %1602 = vmatmul.mubr.bf16.gmra.mxu0 %v1433
        %v1603 = vpop.f32.mrf.mxu0
        %v1604 = vadd.f32 %v1463, %v1603
        %v1605 = vpop.f32.mrf.mxu0
        %v1606 = vpop.f32.mrf.mxu0
        %v1607 = vadd.f32 %v1463, %v1606
        %v1608 = vpop.f32.mrf.mxu0
        %1609 = vmatprep.mubr.bf16.mxu0 0
        %1610 = vmatmul.mubr.bf16.gmra.mxu0 %v1434
        %v1611 = vpop.f32.mrf.mxu0
        %v1612 = vadd.f32 %v1463, %v1611
        %v1613 = vpop.f32.mrf.mxu0
        %v1614 = vpop.f32.mrf.mxu0
        %v1615 = vadd.f32 %v1463, %v1614
        %v1616 = vpop.f32.mrf.mxu0
        %1617 = vmatprep.mubr.bf16.mxu0 0
        %1618 = vmatmul.mubr.bf16.gmra.mxu0 %v1435
        %v1619 = vpop.f32.mrf.mxu0
        %v1620 = vadd.f32 %v1463, %v1619
        %v1621 = vpop.f32.mrf.mxu0
        %v1622 = vpop.f32.mrf.mxu0
        %v1623 = vadd.f32 %v1463, %v1622
        %v1624 = vpop.f32.mrf.mxu0
        %1625 = vmatprep.mubr.bf16.mxu0 0
        %1626 = vmatmul.mubr.bf16.gmra.mxu0 %v1436
        %v1627 = vpop.f32.mrf.mxu0
        %v1628 = vadd.f32 %v1463, %v1627
        %v1629 = vpop.f32.mrf.mxu0
        %v1630 = vpop.f32.mrf.mxu0
        %v1631 = vadd.f32 %v1463, %v1630
        %v1632 = vpop.f32.mrf.mxu0
        %1633 = vmatprep.mubr.bf16.mxu0 0
        %1634 = vmatmul.mubr.bf16.gmra.mxu0 %v1437
        %v1635 = vpop.f32.mrf.mxu0
        %v1636 = vadd.f32 %v1463, %v1635
        %v1637 = vpop.f32.mrf.mxu0
        %v1638 = vpop.f32.mrf.mxu0
        %v1639 = vadd.f32 %v1463, %v1638
        %v1640 = vpop.f32.mrf.mxu0
        %1641 = vmatprep.mubr.bf16.mxu0 0
        %1642 = vmatmul.mubr.bf16.gmra.mxu0 %v1438
        %v1643 = vpop.f32.mrf.mxu0
        %v1644 = vadd.f32 %v1463, %v1643
        %v1645 = vpop.f32.mrf.mxu0
        %v1646 = vpop.f32.mrf.mxu0
        %v1647 = vadd.f32 %v1463, %v1646
        %v1648 = vpop.f32.mrf.mxu0
        %1649 = vmatprep.mubr.bf16.mxu0 0
        %1650 = vmatmul.mubr.bf16.gmra.mxu0 %v1439
        %v1651 = vpop.f32.mrf.mxu0
        %v1652 = vadd.f32 %v1463, %v1651
        %v1653 = vpop.f32.mrf.mxu0
        %v1654 = vpop.f32.mrf.mxu0
        %v1655 = vadd.f32 %v1463, %v1654
        %v1656 = vpop.f32.mrf.mxu0
        %1657 = vmatprep.mubr.bf16.mxu0 0
        %1658 = vmatmul.mubr.bf16.gmra.mxu0 %v1440
        %v1659 = vpop.f32.mrf.mxu0
        %v1660 = vadd.f32 %v1463, %v1659
        %v1661 = vpop.f32.mrf.mxu0
        %v1662 = vpop.f32.mrf.mxu0
        %v1663 = vadd.f32 %v1463, %v1662
        %v1664 = vpop.f32.mrf.mxu0
        %1665 = vmatprep.mubr.bf16.mxu0 0
        %1666 = vmatmul.mubr.bf16.gmra.mxu0 %v1441
        %v1667 = vpop.f32.mrf.mxu0
        %v1668 = vadd.f32 %v1463, %v1667
        %v1669 = vpop.f32.mrf.mxu0
        %v1670 = vpop.f32.mrf.mxu0
        %v1671 = vadd.f32 %v1463, %v1670
        %v1672 = vpop.f32.mrf.mxu0
        %1673 = vdwg.mxu0
        %v1674 = vmax.f32 %v1548, 0.0
        %v1675 = vmax.f32 %v1551, 0.0
        %v1676 = vmax.f32 %v1556, 0.0
        %v1677 = vmax.f32 %v1559, 0.0
        %v1678 = vmax.f32 %v1564, 0.0
        %v1679 = vmax.f32 %v1567, 0.0
        %v1680 = vmax.f32 %v1572, 0.0
        %v1681 = vmax.f32 %v1575, 0.0
        %v1682 = vmax.f32 %v1580, 0.0
        %v1683 = vmax.f32 %v1583, 0.0
        %v1684 = vmax.f32 %v1588, 0.0
        %v1685 = vmax.f32 %v1591, 0.0
        %v1686 = vmax.f32 %v1596, 0.0
        %v1687 = vmax.f32 %v1599, 0.0
        %v1688 = vmax.f32 %v1604, 0.0
        %v1689 = vmax.f32 %v1607, 0.0
        %v1690 = vmax.f32 %v1612, 0.0
        %v1691 = vmax.f32 %v1615, 0.0
        %v1692 = vmax.f32 %v1620, 0.0
        %v1693 = vmax.f32 %v1623, 0.0
        %v1694 = vmax.f32 %v1628, 0.0
        %v1695 = vmax.f32 %v1631, 0.0
        %v1696 = vmax.f32 %v1636, 0.0
        %v1697 = vmax.f32 %v1639, 0.0
        %v1698 = vmax.f32 %v1644, 0.0
        %v1699 = vmax.f32 %v1647, 0.0
        %v1700 = vmax.f32 %v1652, 0.0
        %v1701 = vmax.f32 %v1655, 0.0
        %v1702 = vmax.f32 %v1660, 0.0
        %v1703 = vmax.f32 %v1663, 0.0
        %v1704 = vmax.f32 %v1668, 0.0
        %v1705 = vmax.f32 %v1671, 0.0
        %v1706 = vpack.c.bf16 %v1675, %v1674
        %v1707 = vpack.c.bf16 %v1677, %v1676
        %v1708 = vpack.c.bf16 %v1679, %v1678
        %v1709 = vpack.c.bf16 %v1681, %v1680
        %v1710 = vpack.c.bf16 %v1683, %v1682
        %v1711 = vpack.c.bf16 %v1685, %v1684
        %v1712 = vpack.c.bf16 %v1687, %v1686
        %v1713 = vpack.c.bf16 %v1689, %v1688
        %v1714 = vpack.c.bf16 %v1691, %v1690
        %v1715 = vpack.c.bf16 %v1693, %v1692
        %v1716 = vpack.c.bf16 %v1695, %v1694
        %v1717 = vpack.c.bf16 %v1697, %v1696
        %v1718 = vpack.c.bf16 %v1699, %v1698
        %v1719 = vpack.c.bf16 %v1701, %v1700
        %v1720 = vpack.c.bf16 %v1703, %v1702
        %v1721 = vpack.c.bf16 %v1705, %v1704
        %v1722 = vld [vmem:[#allocation10] sm:$0xf]
        %v1723 = vld [vmem:[#allocation10 + $0x4] sm:$0xf]
        %v1724 = vld [vmem:[#allocation10 + $0x8] sm:$0xf]
        %v1725 = vld [vmem:[#allocation10 + $0xc] sm:$0xf]
        %v1726 = vld [vmem:[#allocation10 + $0x10] sm:$0xf]
        %v1727 = vld [vmem:[#allocation10 + $0x14] sm:$0xf]
        %v1728 = vld [vmem:[#allocation10 + $0x18] sm:$0xf]
        %v1729 = vld [vmem:[#allocation10 + $0x1c] sm:$0xf]
        %v1730 = vld [vmem:[#allocation10 + $0x20] sm:$0xf]
        %v1731 = vld [vmem:[#allocation10 + $0x24] sm:$0xf]
        %v1732 = vld [vmem:[#allocation10 + $0x28] sm:$0xf]
        %v1733 = vld [vmem:[#allocation10 + $0x2c] sm:$0xf]
        %v1734 = vld [vmem:[#allocation10 + $0x30] sm:$0xf]
        %v1735 = vld [vmem:[#allocation10 + $0x34] sm:$0xf]
        %v1736 = vld [vmem:[#allocation10 + $0x38] sm:$0xf]
        %v1737 = vld [vmem:[#allocation10 + $0x3c] sm:$0xf]
        %v1738 = vld [vmem:[%s8] sm:$0x1]
        %v1740 = vlaneseq
        %v1741 = vshrl.u32 %v1740, 7
        %v1742 = vsub.s32 0, %v1741
        %v1743 = vrot.slane %v1738, %v1742
        %v1761 = vunpack.c.l.b16 %v1722
        %v1762 = vunpack.c.l.b16 %v1723
        %v1763 = vunpack.c.l.b16 %v1724
        %v1764 = vunpack.c.l.b16 %v1725
        %v1765 = vunpack.c.l.b16 %v1726
        %v1766 = vunpack.c.l.b16 %v1727
        %v1767 = vunpack.c.l.b16 %v1728
        %v1768 = vunpack.c.l.b16 %v1729
        %v1769 = vunpack.c.l.b16 %v1730
        %v1770 = vunpack.c.l.b16 %v1731
        %v1771 = vunpack.c.l.b16 %v1732
        %v1772 = vunpack.c.l.b16 %v1733
        %v1773 = vunpack.c.l.b16 %v1734
        %v1774 = vunpack.c.l.b16 %v1735
        %v1775 = vunpack.c.l.b16 %v1736
        %v1776 = vunpack.c.l.b16 %v1737
        %v1777 = vpack.c.b16 %v1762, %v1761
        %v1778 = vpack.c.b16 %v1764, %v1763
        %v1779 = vpack.c.b16 %v1766, %v1765
        %v1780 = vpack.c.b16 %v1768, %v1767
        %v1781 = vpack.c.b16 %v1770, %v1769
        %v1782 = vpack.c.b16 %v1772, %v1771
        %v1783 = vpack.c.b16 %v1774, %v1773
        %v1784 = vpack.c.b16 %v1776, %v1775
        %1793 = vmatprep.subr.bf16.mxu0 0
        %1794 = vmatpush1.bf16.msra.mxu0 %v1784
        %1795 = vmatprep.subr.bf16.mxu0 0
        %1796 = vmatpush1.bf16.msra.mxu0 %v1783
        %1797 = vmatprep.subr.bf16.mxu0 0
        %1798 = vmatpush1.bf16.msra.mxu0 %v1782
        %1799 = vmatprep.subr.bf16.mxu0 0
        %1800 = vmatpush1.bf16.msra.mxu0 %v1781
        %1801 = vmatprep.subr.bf16.mxu0 0
        %1802 = vmatpush1.bf16.msra.mxu0 %v1780
        %1803 = vmatprep.subr.bf16.mxu0 0
        %1804 = vmatpush1.bf16.msra.mxu0 %v1779
        %1805 = vmatprep.subr.bf16.mxu0 0
        %1806 = vmatpush1.bf16.msra.mxu0 %v1778
        %1807 = vmatprep.subr.bf16.mxu0 0
        %1808 = vmatpush1.bf16.msra.mxu0 %v1777
        %1809 = vmatprep.subr.bf16.mxu0 0
        %1810 = vmatpush2.bf16.msra.mxu0 0
        %1811 = vmatprep.subr.bf16.mxu0 0
        %1812 = vmatpush2.bf16.msra.mxu0 0
        %1813 = vmatprep.subr.bf16.mxu0 0
        %1814 = vmatpush2.bf16.msra.mxu0 0
        %1815 = vmatprep.subr.bf16.mxu0 0
        %1816 = vmatpush2.bf16.msra.mxu0 0
        %1817 = vmatprep.subr.bf16.mxu0 0
        %1818 = vmatpush2.bf16.msra.mxu0 0
        %1819 = vmatprep.subr.bf16.mxu0 0
        %1820 = vmatpush2.bf16.msra.mxu0 0
        %1821 = vmatprep.subr.bf16.mxu0 0
        %1822 = vmatpush2.bf16.msra.mxu0 0
        %1823 = vmatprep.subr.bf16.mxu0 0
        %1824 = vmatpush2.bf16.msra.mxu0 0
        %1825 = vmatprep.mubr.bf16.mxu0 0
        %1826 = vmatmul.mubr.bf16.gmra.mxu0 %v1706
        %v1827 = vpop.f32.mrf.mxu0
        %v1828 = vadd.f32 %v1743, %v1827
        %v1829 = vpop.f32.mrf.mxu0
        %v1830 = vpop.f32.mrf.mxu0
        %v1831 = vadd.f32 %v1743, %v1830
        %v1832 = vpop.f32.mrf.mxu0
        %1833 = vmatprep.mubr.bf16.mxu0 0
        %1834 = vmatmul.mubr.bf16.gmra.mxu0 %v1707
        %v1835 = vpop.f32.mrf.mxu0
        %v1836 = vadd.f32 %v1743, %v1835
        %v1837 = vpop.f32.mrf.mxu0
        %v1838 = vpop.f32.mrf.mxu0
        %v1839 = vadd.f32 %v1743, %v1838
        %v1840 = vpop.f32.mrf.mxu0
        %1841 = vmatprep.mubr.bf16.mxu0 0
        %1842 = vmatmul.mubr.bf16.gmra.mxu0 %v1708
        %v1843 = vpop.f32.mrf.mxu0
        %v1844 = vadd.f32 %v1743, %v1843
        %v1845 = vpop.f32.mrf.mxu0
        %v1846 = vpop.f32.mrf.mxu0
        %v1847 = vadd.f32 %v1743, %v1846
        %v1848 = vpop.f32.mrf.mxu0
        %1849 = vmatprep.mubr.bf16.mxu0 0
        %1850 = vmatmul.mubr.bf16.gmra.mxu0 %v1709
        %v1851 = vpop.f32.mrf.mxu0
        %v1852 = vadd.f32 %v1743, %v1851
        %v1853 = vpop.f32.mrf.mxu0
        %v1854 = vpop.f32.mrf.mxu0
        %v1855 = vadd.f32 %v1743, %v1854
        %v1856 = vpop.f32.mrf.mxu0
        %1857 = vmatprep.mubr.bf16.mxu0 0
        %1858 = vmatmul.mubr.bf16.gmra.mxu0 %v1710
        %v1859 = vpop.f32.mrf.mxu0
        %v1860 = vadd.f32 %v1743, %v1859
        %v1861 = vpop.f32.mrf.mxu0
        %v1862 = vpop.f32.mrf.mxu0
        %v1863 = vadd.f32 %v1743, %v1862
        %v1864 = vpop.f32.mrf.mxu0
        %1865 = vmatprep.mubr.bf16.mxu0 0
        %1866 = vmatmul.mubr.bf16.gmra.mxu0 %v1711
        %v1867 = vpop.f32.mrf.mxu0
        %v1868 = vadd.f32 %v1743, %v1867
        %v1869 = vpop.f32.mrf.mxu0
        %v1870 = vpop.f32.mrf.mxu0
        %v1871 = vadd.f32 %v1743, %v1870
        %v1872 = vpop.f32.mrf.mxu0
        %1873 = vmatprep.mubr.bf16.mxu0 0
        %1874 = vmatmul.mubr.bf16.gmra.mxu0 %v1712
        %v1875 = vpop.f32.mrf.mxu0
        %v1876 = vadd.f32 %v1743, %v1875
        %v1877 = vpop.f32.mrf.mxu0
        %v1878 = vpop.f32.mrf.mxu0
        %v1879 = vadd.f32 %v1743, %v1878
        %v1880 = vpop.f32.mrf.mxu0
        %1881 = vmatprep.mubr.bf16.mxu0 0
        %1882 = vmatmul.mubr.bf16.gmra.mxu0 %v1713
        %v1883 = vpop.f32.mrf.mxu0
        %v1884 = vadd.f32 %v1743, %v1883
        %v1885 = vpop.f32.mrf.mxu0
        %v1886 = vpop.f32.mrf.mxu0
        %v1887 = vadd.f32 %v1743, %v1886
        %v1888 = vpop.f32.mrf.mxu0
        %1889 = vmatprep.mubr.bf16.mxu0 0
        %1890 = vmatmul.mubr.bf16.gmra.mxu0 %v1714
        %v1891 = vpop.f32.mrf.mxu0
        %v1892 = vadd.f32 %v1743, %v1891
        %v1893 = vpop.f32.mrf.mxu0
        %v1894 = vpop.f32.mrf.mxu0
        %v1895 = vadd.f32 %v1743, %v1894
        %v1896 = vpop.f32.mrf.mxu0
        %1897 = vmatprep.mubr.bf16.mxu0 0
        %1898 = vmatmul.mubr.bf16.gmra.mxu0 %v1715
        %v1899 = vpop.f32.mrf.mxu0
        %v1900 = vadd.f32 %v1743, %v1899
        %v1901 = vpop.f32.mrf.mxu0
        %v1902 = vpop.f32.mrf.mxu0
        %v1903 = vadd.f32 %v1743, %v1902
        %v1904 = vpop.f32.mrf.mxu0
        %1905 = vmatprep.mubr.bf16.mxu0 0
        %1906 = vmatmul.mubr.bf16.gmra.mxu0 %v1716
        %v1907 = vpop.f32.mrf.mxu0
        %v1908 = vadd.f32 %v1743, %v1907
        %v1909 = vpop.f32.mrf.mxu0
        %v1910 = vpop.f32.mrf.mxu0
        %v1911 = vadd.f32 %v1743, %v1910
        %v1912 = vpop.f32.mrf.mxu0
        %1913 = vmatprep.mubr.bf16.mxu0 0
        %1914 = vmatmul.mubr.bf16.gmra.mxu0 %v1717
        %v1915 = vpop.f32.mrf.mxu0
        %v1916 = vadd.f32 %v1743, %v1915
        %v1917 = vpop.f32.mrf.mxu0
        %v1918 = vpop.f32.mrf.mxu0
        %v1919 = vadd.f32 %v1743, %v1918
        %v1920 = vpop.f32.mrf.mxu0
        %1921 = vmatprep.mubr.bf16.mxu0 0
        %1922 = vmatmul.mubr.bf16.gmra.mxu0 %v1718
        %v1923 = vpop.f32.mrf.mxu0
        %v1924 = vadd.f32 %v1743, %v1923
        %v1925 = vpop.f32.mrf.mxu0
        %v1926 = vpop.f32.mrf.mxu0
        %v1927 = vadd.f32 %v1743, %v1926
        %v1928 = vpop.f32.mrf.mxu0
        %1929 = vmatprep.mubr.bf16.mxu0 0
        %1930 = vmatmul.mubr.bf16.gmra.mxu0 %v1719
        %v1931 = vpop.f32.mrf.mxu0
        %v1932 = vadd.f32 %v1743, %v1931
        %v1933 = vpop.f32.mrf.mxu0
        %v1934 = vpop.f32.mrf.mxu0
        %v1935 = vadd.f32 %v1743, %v1934
        %v1936 = vpop.f32.mrf.mxu0
        %1937 = vmatprep.mubr.bf16.mxu0 0
        %1938 = vmatmul.mubr.bf16.gmra.mxu0 %v1720
        %v1939 = vpop.f32.mrf.mxu0
        %v1940 = vadd.f32 %v1743, %v1939
        %v1941 = vpop.f32.mrf.mxu0
        %v1942 = vpop.f32.mrf.mxu0
        %v1943 = vadd.f32 %v1743, %v1942
        %v1944 = vpop.f32.mrf.mxu0
        %1945 = vmatprep.mubr.bf16.mxu0 0
        %1946 = vmatmul.mubr.bf16.gmra.mxu0 %v1721
        %v1947 = vpop.f32.mrf.mxu0
        %v1948 = vadd.f32 %v1743, %v1947
        %v1949 = vpop.f32.mrf.mxu0
        %v1950 = vpop.f32.mrf.mxu0
        %v1951 = vadd.f32 %v1743, %v1950
        %v1952 = vpop.f32.mrf.mxu0
        %1953 = vdwg.mxu0
        %v1954 = vxor.u32 %v1828, 2147483648
        %v1955 = vxor.u32 %v1831, 2147483648
        %v1956 = vxor.u32 %v1836, 2147483648
        %v1957 = vxor.u32 %v1839, 2147483648
        %v1958 = vxor.u32 %v1844, 2147483648
        %v1959 = vxor.u32 %v1847, 2147483648
        %v1960 = vxor.u32 %v1852, 2147483648
        %v1961 = vxor.u32 %v1855, 2147483648
        %v1962 = vxor.u32 %v1860, 2147483648
        %v1963 = vxor.u32 %v1863, 2147483648
        %v1964 = vxor.u32 %v1868, 2147483648
        %v1965 = vxor.u32 %v1871, 2147483648
        %v1966 = vxor.u32 %v1876, 2147483648
        %v1967 = vxor.u32 %v1879, 2147483648
        %v1968 = vxor.u32 %v1884, 2147483648
        %v1969 = vxor.u32 %v1887, 2147483648
        %v1970 = vxor.u32 %v1892, 2147483648
        %v1971 = vxor.u32 %v1895, 2147483648
        %v1972 = vxor.u32 %v1900, 2147483648
        %v1973 = vxor.u32 %v1903, 2147483648
        %v1974 = vxor.u32 %v1908, 2147483648
        %v1975 = vxor.u32 %v1911, 2147483648
        %v1976 = vxor.u32 %v1916, 2147483648
        %v1977 = vxor.u32 %v1919, 2147483648
        %v1978 = vxor.u32 %v1924, 2147483648
        %v1979 = vxor.u32 %v1927, 2147483648
        %v1980 = vxor.u32 %v1932, 2147483648
        %v1981 = vxor.u32 %v1935, 2147483648
        %v1982 = vxor.u32 %v1940, 2147483648
        %v1983 = vxor.u32 %v1943, 2147483648
        %v1984 = vxor.u32 %v1948, 2147483648
        %v1985 = vxor.u32 %v1951, 2147483648
        %v1986 = vmul.f32 %v1954, 1.442695
        %v1987 = vpow.pop %v1986
        %v1988 = vmul.f32 %v1955, 1.442695
        %v1989 = vpow.pop %v1988
        %v1990 = vmul.f32 %v1956, 1.442695
        %v1991 = vpow.pop %v1990
        %v1992 = vmul.f32 %v1957, 1.442695
        %v1993 = vpow.pop %v1992
        %v1994 = vmul.f32 %v1958, 1.442695
        %v1995 = vpow.pop %v1994
        %v1996 = vmul.f32 %v1959, 1.442695
        %v1997 = vpow.pop %v1996
        %v1998 = vmul.f32 %v1960, 1.442695
        %v1999 = vpow.pop %v1998
        %v2000 = vmul.f32 %v1961, 1.442695
        %v2001 = vpow.pop %v2000
        %v2002 = vmul.f32 %v1962, 1.442695
        %v2003 = vpow.pop %v2002
        %v2004 = vmul.f32 %v1963, 1.442695
        %v2005 = vpow.pop %v2004
        %v2006 = vmul.f32 %v1964, 1.442695
        %v2007 = vpow.pop %v2006
        %v2008 = vmul.f32 %v1965, 1.442695
        %v2009 = vpow.pop %v2008
        %v2010 = vmul.f32 %v1966, 1.442695
        %v2011 = vpow.pop %v2010
        %v2012 = vmul.f32 %v1967, 1.442695
        %v2013 = vpow.pop %v2012
        %v2014 = vmul.f32 %v1968, 1.442695
        %v2015 = vpow.pop %v2014
        %v2016 = vmul.f32 %v1969, 1.442695
        %v2017 = vpow.pop %v2016
        %v2018 = vmul.f32 %v1970, 1.442695
        %v2019 = vpow.pop %v2018
        %v2020 = vmul.f32 %v1971, 1.442695
        %v2021 = vpow.pop %v2020
        %v2022 = vmul.f32 %v1972, 1.442695
        %v2023 = vpow.pop %v2022
        %v2024 = vmul.f32 %v1973, 1.442695
        %v2025 = vpow.pop %v2024
        %v2026 = vmul.f32 %v1974, 1.442695
        %v2027 = vpow.pop %v2026
        %v2028 = vmul.f32 %v1975, 1.442695
        %v2029 = vpow.pop %v2028
        %v2030 = vmul.f32 %v1976, 1.442695
        %v2031 = vpow.pop %v2030
        %v2032 = vmul.f32 %v1977, 1.442695
        %v2033 = vpow.pop %v2032
        %v2034 = vmul.f32 %v1978, 1.442695
        %v2035 = vpow.pop %v2034
        %v2036 = vmul.f32 %v1979, 1.442695
        %v2037 = vpow.pop %v2036
        %v2038 = vmul.f32 %v1980, 1.442695
        %v2039 = vpow.pop %v2038
        %v2040 = vmul.f32 %v1981, 1.442695
        %v2041 = vpow.pop %v2040
        %v2042 = vmul.f32 %v1982, 1.442695
        %v2043 = vpow.pop %v2042
        %v2044 = vmul.f32 %v1983, 1.442695
        %v2045 = vpow.pop %v2044
        %v2046 = vmul.f32 %v1984, 1.442695
        %v2047 = vpow.pop %v2046
        %v2048 = vmul.f32 %v1985, 1.442695
        %v2049 = vpow.pop %v2048
        %v2050 = vadd.f32 %v1987, 1.0
        %v2051 = vadd.f32 %v1989, 1.0
        %v2052 = vadd.f32 %v1991, 1.0
        %v2053 = vadd.f32 %v1993, 1.0
        %v2054 = vadd.f32 %v1995, 1.0
        %v2055 = vadd.f32 %v1997, 1.0
        %v2056 = vadd.f32 %v1999, 1.0
        %v2057 = vadd.f32 %v2001, 1.0
        %v2058 = vadd.f32 %v2003, 1.0
        %v2059 = vadd.f32 %v2005, 1.0
        %v2060 = vadd.f32 %v2007, 1.0
        %v2061 = vadd.f32 %v2009, 1.0
        %v2062 = vadd.f32 %v2011, 1.0
        %v2063 = vadd.f32 %v2013, 1.0
        %v2064 = vadd.f32 %v2015, 1.0
        %v2065 = vadd.f32 %v2017, 1.0
        %v2066 = vadd.f32 %v2019, 1.0
        %v2067 = vadd.f32 %v2021, 1.0
        %v2068 = vadd.f32 %v2023, 1.0
        %v2069 = vadd.f32 %v2025, 1.0
        %v2070 = vadd.f32 %v2027, 1.0
        %v2071 = vadd.f32 %v2029, 1.0
        %v2072 = vadd.f32 %v2031, 1.0
        %v2073 = vadd.f32 %v2033, 1.0
        %v2074 = vadd.f32 %v2035, 1.0
        %v2075 = vadd.f32 %v2037, 1.0
        %v2076 = vadd.f32 %v2039, 1.0
        %v2077 = vadd.f32 %v2041, 1.0
        %v2078 = vadd.f32 %v2043, 1.0
        %v2079 = vadd.f32 %v2045, 1.0
        %v2080 = vadd.f32 %v2047, 1.0
        %v2081 = vadd.f32 %v2049, 1.0
        %v2082 = vrcp.pop %v2050
        %v2083 = vmul.f32 1.0, %v2082
        %v2084 = vrcp.pop %v2051
        %v2085 = vmul.f32 1.0, %v2084
        %v2086 = vrcp.pop %v2052
        %v2087 = vmul.f32 1.0, %v2086
        %v2088 = vrcp.pop %v2053
        %v2089 = vmul.f32 1.0, %v2088
        %v2090 = vrcp.pop %v2054
        %v2091 = vmul.f32 1.0, %v2090
        %v2092 = vrcp.pop %v2055
        %v2093 = vmul.f32 1.0, %v2092
        %v2094 = vrcp.pop %v2056
        %v2095 = vmul.f32 1.0, %v2094
        %v2096 = vrcp.pop %v2057
        %v2097 = vmul.f32 1.0, %v2096
        %v2098 = vrcp.pop %v2058
        %v2099 = vmul.f32 1.0, %v2098
        %v2100 = vrcp.pop %v2059
        %v2101 = vmul.f32 1.0, %v2100
        %v2102 = vrcp.pop %v2060
        %v2103 = vmul.f32 1.0, %v2102
        %v2104 = vrcp.pop %v2061
        %v2105 = vmul.f32 1.0, %v2104
        %v2106 = vrcp.pop %v2062
        %v2107 = vmul.f32 1.0, %v2106
        %v2108 = vrcp.pop %v2063
        %v2109 = vmul.f32 1.0, %v2108
        %v2110 = vrcp.pop %v2064
        %v2111 = vmul.f32 1.0, %v2110
        %v2112 = vrcp.pop %v2065
        %v2113 = vmul.f32 1.0, %v2112
        %v2114 = vrcp.pop %v2066
        %v2115 = vmul.f32 1.0, %v2114
        %v2116 = vrcp.pop %v2067
        %v2117 = vmul.f32 1.0, %v2116
        %v2118 = vrcp.pop %v2068
        %v2119 = vmul.f32 1.0, %v2118
        %v2120 = vrcp.pop %v2069
        %v2121 = vmul.f32 1.0, %v2120
        %v2122 = vrcp.pop %v2070
        %v2123 = vmul.f32 1.0, %v2122
        %v2124 = vrcp.pop %v2071
        %v2125 = vmul.f32 1.0, %v2124
        %v2126 = vrcp.pop %v2072
        %v2127 = vmul.f32 1.0, %v2126
        %v2128 = vrcp.pop %v2073
        %v2129 = vmul.f32 1.0, %v2128
        %v2130 = vrcp.pop %v2074
        %v2131 = vmul.f32 1.0, %v2130
        %v2132 = vrcp.pop %v2075
        %v2133 = vmul.f32 1.0, %v2132
        %v2134 = vrcp.pop %v2076
        %v2135 = vmul.f32 1.0, %v2134
        %v2136 = vrcp.pop %v2077
        %v2137 = vmul.f32 1.0, %v2136
        %v2138 = vrcp.pop %v2078
        %v2139 = vmul.f32 1.0, %v2138
        %v2140 = vrcp.pop %v2079
        %v2141 = vmul.f32 1.0, %v2140
        %v2142 = vrcp.pop %v2080
        %v2143 = vmul.f32 1.0, %v2142
        %v2144 = vrcp.pop %v2081
        %v2145 = vmul.f32 1.0, %v2144
        %2146 = vst [vmem:[%s409] sm:$0xff] %v2083
        %2147 = vst [vmem:[%s409 + $0x8] sm:$0xff] %v2085
        %2148 = vst [vmem:[%s409 + $0x10] sm:$0xff] %v2087
        %2149 = vst [vmem:[%s409 + $0x18] sm:$0xff] %v2089
        %2150 = vst [vmem:[%s409 + $0x20] sm:$0xff] %v2091
        %2151 = vst [vmem:[%s409 + $0x28] sm:$0xff] %v2093
        %2152 = vst [vmem:[%s409 + $0x30] sm:$0xff] %v2095
        %2153 = vst [vmem:[%s409 + $0x38] sm:$0xff] %v2097
        %2154 = vst [vmem:[%s409 + $0x40] sm:$0xff] %v2099
        %2155 = vst [vmem:[%s409 + $0x48] sm:$0xff] %v2101
        %2156 = vst [vmem:[%s409 + $0x50] sm:$0xff] %v2103
        %2157 = vst [vmem:[%s409 + $0x58] sm:$0xff] %v2105
        %2158 = vst [vmem:[%s409 + $0x60] sm:$0xff] %v2107
        %2159 = vst [vmem:[%s409 + $0x68] sm:$0xff] %v2109
        %2160 = vst [vmem:[%s409 + $0x70] sm:$0xff] %v2111
        %2161 = vst [vmem:[%s409 + $0x78] sm:$0xff] %v2113
        %2162 = vst [vmem:[%s409 + $0x80] sm:$0xff] %v2115
        %2163 = vst [vmem:[%s409 + $0x88] sm:$0xff] %v2117
        %2164 = vst [vmem:[%s409 + $0x90] sm:$0xff] %v2119
        %2165 = vst [vmem:[%s409 + $0x98] sm:$0xff] %v2121
        %2166 = vst [vmem:[%s409 + $0xa0] sm:$0xff] %v2123
        %2167 = vst [vmem:[%s409 + $0xa8] sm:$0xff] %v2125
        %2168 = vst [vmem:[%s409 + $0xb0] sm:$0xff] %v2127
        %2169 = vst [vmem:[%s409 + $0xb8] sm:$0xff] %v2129
        %2170 = vst [vmem:[%s409 + $0xc0] sm:$0xff] %v2131
        %2171 = vst [vmem:[%s409 + $0xc8] sm:$0xff] %v2133
        %2172 = vst [vmem:[%s409 + $0xd0] sm:$0xff] %v2135
        %2173 = vst [vmem:[%s409 + $0xd8] sm:$0xff] %v2137
        %2174 = vst [vmem:[%s409 + $0xe0] sm:$0xff] %v2139
        %2175 = vst [vmem:[%s409 + $0xe8] sm:$0xff] %v2141
        %2176 = vst [vmem:[%s409 + $0xf0] sm:$0xff] %v2143
        %2177 = vst [vmem:[%s409 + $0xf8] sm:$0xff] %v2145
        %s2178 = sand.u32 %s230, 1
        %s2179 = scalar_lea.sflag [#allocation4], %s2178
        %s2180 = sand.u32 %s230, 1
        %s2181 = smul.addr %s2180, 256
        %s2182 = scalar_lea.vmem [#allocation11], %s2181
        // Predicated region
        $region77: #{tpu_custom_call.1} parent=55 // pred_check
          %p2183 = pneg %p240
        $region78: #{tpu_custom_call.1} parent=55 // pred_check_branch
          %2185 = sbr.rel (%p2183) target = $region80
        $region79: #{tpu_custom_call.1} parent=55 // pred_region
          %s2186 = smul.u32 32, %s28
          %s2188 = ssub.s32 4096, 4096
          %2189 = vsyncadd %s2179, %s2188
          %s2190 = smul.addr %s2186, 128
          %s2191 = scalar_lea.hbm %s9, %s2190
          %s2192 = sshll.u32 %s2182, 4
          %s2193 = int_to_ptr.vmem [resolvable:$true] %s2192
          %2198 = dma.vmem_to_hbm [thread:$0]  %s2193, 4096, %s2191, %s2179, 128, 128, 8
        $region80: #{tpu_custom_call.1} parent=55 // pred_fallthru
          _
      $region56: #{tpu_custom_call.1} parent=5 // pred_fallthru
        _
      %p2199 = scmp.le.s32.totalorder 2, %s23
      // Predicated region
      $region81: #{tpu_custom_call.1} parent=5 // pred_check
        %p2200 = pneg %p2199
      $region82: #{tpu_custom_call.1} parent=5 // pred_check_branch
        %2202 = sbr.rel (%p2200) target = $region84
      $region83: #{tpu_custom_call.1} parent=5 // pred_region
        %s2203 = ssub.s32 %s23, 2
        // Predicated region
        $region85: #{tpu_custom_call.1} parent=83 // pred_check
          %p2204 = pneg %p246
        $region86: #{tpu_custom_call.1} parent=83 // pred_check_branch
          %2206 = sbr.rel (%p2204) target = $region88
        $region87: #{tpu_custom_call.1} parent=83 // pred_region
          %s2207 = sand.u32 %s231, 1
          %s2208 = scalar_lea.sflag [#allocation4], %s2207
          %s2209 = sand.u32 %s231, 1
          %s2210 = smul.addr %s2209, 256
          %s2211 = scalar_lea.vmem [#allocation11], %s2210
          %2212 = dma.done %s2208, 4096
        $region88: #{tpu_custom_call.1} parent=83 // pred_fallthru
          _
      $region84: #{tpu_custom_call.1} parent=5 // pred_fallthru
        _
    $region6: #{tpu_custom_call.1} parent=1 // loop_footer
      %s27 = sadd.s32 1, %s23
    $region7: #{tpu_custom_call.1} parent=1 // loop_footer_branch
      %22 = sbr.rel target = $region3
    $region8: #{tpu_custom_call.1} parent=1 // loop_exit
      _
    %2213 = vsyncpa [#allocation3], 1
    %s2214 = scalar_lea.sflag [#allocation3], 1
    %2215 = vsyncpa %s2214, 1
    %2216 = vsyncpa [#allocation6], 1
    %2217 = vsyncpa [#allocation9], 1
    %2218 = vsyncpa [#allocation4], 1
    %s2219 = scalar_lea.sflag [#allocation4], 1
    %2220 = vsyncpa %s2219, 1

</llo_original>
